<compile_context>
chip_gen: v5e
topology: v5e:2x2
jax: 0.10.0
libtpu: 0.0.40
codegen_flags: <defaults>
</compile_context>

<pallas_src>
import math
from functools import partial

import numpy as np
import jax
import jax.numpy as jnp
from jax.experimental import pallas as pl
from jax.experimental.pallas import tpu as pltpu


# -----------------------------------------------------------------------------
# In-kernel math helpers
# -----------------------------------------------------------------------------
_SQRT_HALF = 1.0 / math.sqrt(2.0)


def _erf(x):
    # TODO(synk): exact erf lowering inside Mosaic is not guaranteed; use
    # Abramowitz & Stegun 7.1.26 (|abs err| <= 1.5e-7).  If bundle dumps show
    # VALU saturating in the MLP phase, switch to the tanh-form GELU (EUP slot).
    a1, a2, a3, a4, a5 = 0.254829592, -0.284496736, 1.421413741, -1.453152027, 1.061405429
    p = 0.3275911
    ax = jnp.abs(x)
    t = 1.0 / (1.0 + p * ax)
    poly = ((((a5 * t + a4) * t + a3) * t + a2) * t + a1) * t
    y = 1.0 - poly * jnp.exp(-ax * ax)
    return jnp.where(x >= 0, y, -y)


def _gelu_exact(x):
    return x * 0.5 * (1.0 + _erf(x * _SQRT_HALF))


# Packed per-layer vector-parameter rows (L, 11, D), float32
_ATTN_G, _ATTN_B, _LL_G, _LL_B, _LG_G, _LG_B = 0, 1, 2, 3, 4, 5
_B_LOC, _B_GLB, _MLP_G, _MLP_B, _B_FC2 = 6, 7, 8, 9, 10
_NV = 11
# Packed per-layer folded square weights (L, 3, D, D), bfloat16
_W_LOC, _WP_L, _W_GLB = 0, 1, 2


def _pick_tile(n, candidates=(2048, 1024, 512, 256, 128)):
    """Largest lane-aligned tile that divides n (else n itself)."""
    for t in candidates:
        if t <= n and n % t == 0:
            return t
    return n


def _vmem_limit_bytes():
    # Size the scoped-VMEM limit from the actual chip (v5e/v6e: 128 MiB,
    # v7x: 64 MiB), leaving headroom; fall back to a safe 64 MiB.
    try:
        cap = int(pltpu.get_tpu_info().vmem_capacity_bytes)
    except Exception:
        cap = 64 * 1024 * 1024
    return max(32 * 1024 * 1024, min(int(cap * 0.75), 100 * 1024 * 1024))


# -----------------------------------------------------------------------------
# Kernel 1: fused decoder trunk.
#   grid = (n_layer, n_mlp_hidden_tiles)
#   x lives in a VMEM scratch across the whole grid; per-layer attention weights
#   and per-(layer, tile) MLP weight slabs are streamed (and prefetched) bf16.
#   Epilogue (last layer, last tile) applies the final LayerNorm once.
# -----------------------------------------------------------------------------
def _decoder_blocks_kernel(x_in_ref, wsq_ref, vec_ref, w1_ref, b1_ref, w2_ref,
                           lng_ref, lnb_ref, xn_ref, x_acc, hbuf,
                           *, seq, batch, local_rows):
    layer = pl.program_id(0)
    htile = pl.program_id(1)

    def ln(v, g, b):
        mu = jnp.mean(v, axis=-1, keepdims=True)
        vc = v - mu
        var = jnp.mean(vc * vc, axis=-1, keepdims=True)
        return vc * jax.lax.rsqrt(var + 1e-5) * g + b

    V = vec_ref[0]        # (11, D)   f32: LN gammas/betas + folded biases
    W = wsq_ref[0]        # (3, D, D) bf16: folded attention weights

    @pl.when((layer == 0) & (htile == 0))
    def _init():
        x_acc[...] = x_in_ref[...]          # rotated embeddings (rotary hoisted)
        xn_ref[...] = jnp.zeros_like(xn_ref)

    # ---- per-layer prologue: attention branch + mlp_ln (hidden-tile 0) -------
    @pl.when(htile == 0)
    def _attn():
        x = x_acc[...]                      # (batch*seq, D) resident activation
        x0 = x[0:seq, :]                    # only batch-0 of the attention survives
        z = ln(x0, V[_ATTN_G:_ATTN_G + 1], V[_ATTN_B:_ATTN_B + 1])
        zl = ln(z, V[_LL_G:_LL_G + 1], V[_LL_B:_LL_B + 1]).astype(jnp.bfloat16)
        zg = ln(z, V[_LG_G:_LG_G + 1], V[_LG_B:_LG_B + 1]).astype(jnp.bfloat16)

        # local branch: span==1 -> out(value(key)); folded Wv_l@Wo_l, mask, Wp_l
        lv = (jnp.dot(zl, W[_W_LOC], preferred_element_type=jnp.float32)
              + V[_B_LOC:_B_LOC + 1])
        rows = jax.lax.broadcasted_iota(jnp.int32, (seq, 1), 0)
        lv = jnp.where(rows < local_rows, lv, 0.0)  # sliding window leaves rest zero
        # global branch: causal over batch axis -> query 0 sees key 0 only; fully folded
        a0 = (jnp.dot(lv.astype(jnp.bfloat16), W[_WP_L],
                      preferred_element_type=jnp.float32)
              + jnp.dot(zg, W[_W_GLB], preferred_element_type=jnp.float32)
              + V[_B_GLB:_B_GLB + 1])

        # residual: attn_out[0] broadcast over the batch (no per-batch copies)
        x = (x.reshape(batch, seq, -1) + a0[None, :, :]).reshape(batch * seq, -1)
        hbuf[...] = ln(x, V[_MLP_G:_MLP_G + 1], V[_MLP_B:_MLP_B + 1])
        # fold the fc2 bias into the residual once (commutes with the tile adds)
        x_acc[...] = x + V[_B_FC2:_B_FC2 + 1]

    # ---- MLP partial for this hidden tile ------------------------------------
    h = (jnp.dot(hbuf[...].astype(jnp.bfloat16), w1_ref[0],
                 preferred_element_type=jnp.float32) + b1_ref[0])
    h = _gelu_exact(h)
    x_acc[...] = x_acc[...] + jnp.dot(h.astype(jnp.bfloat16), w2_ref[0],
                                      preferred_element_type=jnp.float32)

    # ---- final LayerNorm epilogue (computed once, not per vocab tile) --------
    @pl.when((layer == pl.num_programs(0) - 1) & (htile == pl.num_programs(1) - 1))
    def _final():
        xn_ref[...] = ln(x_acc[...], lng_ref[...], lnb_ref[...])


def decoder_blocks(x2d, packed, lnf_g, lnf_b, batch, seq, cfg):
    M, D = x2d.shape
    L = packed["Wsq"].shape[0]
    H4 = packed["W1"].shape[-1]
    th = _pick_tile(H4)                   # MLP-hidden tile (bounds per-step VMEM)
    T = H4 // th
    window = cfg["max_rel_dist"]          # HybridAttention.window_size (positional quirk)
    # TODO(synk): batch > window would hit the reference's ill-formed multi-window
    # SDPA (mismatched batch dims in torch); only the single-window case is implemented.
    local_rows = min(window, batch, seq)
    # TODO(synk): on v7x a second "parallel" row-tile axis (or pl.core_map) could use
    # the second TensorCore for the full-batch MLP; kept single-core here.
    kern = partial(_decoder_blocks_kernel, seq=seq, batch=batch, local_rows=local_rows)
    return pl.pallas_call(
        kern,
        out_shape=jax.ShapeDtypeStruct((M, D), jnp.float32),
        grid=(L, T),
        in_specs=[
            pl.BlockSpec((M, D), lambda l, t: (0, 0)),              # rotated embeddings
            pl.BlockSpec((1, 3, D, D), lambda l, t: (l, 0, 0, 0)),  # folded attn weights bf16
            pl.BlockSpec((1, _NV, D), lambda l, t: (l, 0, 0)),      # LN params + folded biases
            pl.BlockSpec((1, D, th), lambda l, t: (l, 0, t)),       # fc1 weight tile bf16
            pl.BlockSpec((1, 1, th), lambda l, t: (l, 0, t)),       # fc1 bias tile
            pl.BlockSpec((1, th, D), lambda l, t: (l, t, 0)),       # fc2 weight tile bf16
            pl.BlockSpec((1, D), lambda l, t: (0, 0)),              # final LN gamma
            pl.BlockSpec((1, D), lambda l, t: (0, 0)),              # final LN beta
        ],
        out_specs=pl.BlockSpec((M, D), lambda l, t: (0, 0)),        # ln(x) written at the end
        scratch_shapes=[pltpu.VMEM((M, D), jnp.float32),            # resident activation x
                        pltpu.VMEM((M, D), jnp.float32)],           # mlp_ln(x) buffer
        compiler_params=pltpu.CompilerParams(
            dimension_semantics=("arbitrary", "arbitrary"),
            vmem_limit_bytes=_vmem_limit_bytes()),
    )(x2d, packed["Wsq"], packed["Vvec"], packed["W1"], packed["b1"], packed["W2"],
      lnf_g.reshape(1, D), lnf_b.reshape(1, D))


# -----------------------------------------------------------------------------
# Kernel 2: tied vocab projection (pure matmul; LN already applied in kernel 1),
# tiled over the (pre-padded, bf16) vocab axis.
# -----------------------------------------------------------------------------
def _logits_kernel(x_ref, w_ref, o_ref):
    o_ref[...] = jnp.dot(x_ref[...].astype(jnp.bfloat16), w_ref[...],
                         preferred_element_type=jnp.float32)


def pallas_logits(xn, w_vocab, vocab_size, vocab_tile=1024):
    M, D = xn.shape
    VP = w_vocab.shape[1]                       # already padded to a 128 multiple
    tn = _pick_tile(VP, candidates=tuple(t for t in (2048, 1024, 512, 256, 128)
                                         if t <= vocab_tile))
    out = pl.pallas_call(
        _logits_kernel,
        out_shape=jax.ShapeDtypeStruct((M, VP), jnp.float32),
        grid=(VP // tn,),
        in_specs=[pl.BlockSpec((M, D), lambda j: (0, 0)),
                  pl.BlockSpec((D, tn), lambda j: (0, j))],
        out_specs=pl.BlockSpec((M, tn), lambda j: (0, j)),
        compiler_params=pltpu.CompilerParams(
            dimension_semantics=("parallel",),
            vmem_limit_bytes=_vmem_limit_bytes()),
    )(xn, w_vocab)
    return out[:, :vocab_size] if VP != vocab_size else out


# -----------------------------------------------------------------------------
# Forward pass glue (embedding gather / rotary prologue stay in plain JAX)
# -----------------------------------------------------------------------------
def text_decoder_forward(tokens, xa, params, packed, cfg):
    B, S = tokens.shape
    D, H = cfg["n_state"], cfg["n_head"]

    # _embedding_forward (kv_cache=None -> offset 0); F.normalize(p=2, eps=1e-12)
    pe = params["pos_emb"][jnp.arange(S)]
    pe = pe / jnp.maximum(jnp.linalg.norm(pe, axis=-1, keepdims=True), 1e-12)
    x = params["tok_emb"][tokens] + pe[None]
    x = x.astype(xa.dtype).reshape(B * S, D)

    # Decoder-level CombinedRotaryEmbedding, hoisted out of the fused trunk
    # (tiny (D,D) matmuls; frees the trunk's resident VMEM for weight streaming).
    rot = params["rotary"]
    pos = jnp.arange(S, dtype=jnp.float32)
    sinus = pos[:, None] * rot["inv_freq"][None, :]                # (S, Dh/2)
    cos_t = jnp.concatenate([jnp.cos(sinus), jnp.sin(sinus)], axis=-1)
    sin_t = jnp.concatenate([-jnp.sin(sinus), jnp.cos(sinus)], axis=-1)
    cos_t = jnp.tile(jnp.tile(cos_t, (1, H)), (B, 1))              # (B*S, D)
    sin_t = jnp.tile(jnp.tile(sin_t, (1, H)), (B, 1))
    x = (x @ packed["A_blk"]) * cos_t + (x @ packed["B_blk"]) * sin_t

    xn = decoder_blocks(x, packed, params["ln"]["g"], params["ln"]["b"], B, S, cfg)
    logits = pallas_logits(xn, packed["Wvocab"], packed["vocab_size"])
    return logits.reshape(B, S, -1).astype(jnp.float32)


# -----------------------------------------------------------------------------
# Deterministic parameter initialization (shapes follow the PyTorch __init__).
# Parameters that are mathematically dead on this forward path (per-MHA rotary,
# q/k projections, positional_scaling, rel_pos_bias) are still created for
# state-dict parity but never computed.
# -----------------------------------------------------------------------------
def init_params(key, cfg):
    V, C, D, H, L = (cfg["vocab_size"], cfg["n_ctx"], cfg["n_state"],
                     cfg["n_head"], cfg["n_layer"])
    Dh = D // H
    keys = iter(jax.random.split(key, 512))

    def nk():
        return next(keys)

    def linear_p(in_f, out_f, bias=True, scale=0.05):
        w = jax.random.normal(nk(), (out_f, in_f), jnp.float32) * scale
        b = (jax.random.normal(nk(), (out_f,), jnp.float32) * scale
             if bias else jnp.zeros((out_f,), jnp.float32))
        return {"w_t": jnp.transpose(w), "b": b}

    def ln_p(dim):
        return {"g": jnp.ones((dim,), jnp.float32), "b": jnp.zeros((dim,), jnp.float32)}

    def rotary_p(base):
        num_rot = Dh // 2
        thetas = np.zeros((num_rot,), np.float32)                         # zeros init
        pairs = np.asarray(jax.random.uniform(nk(), (num_rot, 2))) * Dh   # rand * h_dim
        rot_mat = np.eye(Dh, dtype=np.float32)                            # eye init
        R = np.eye(Dh, dtype=np.float32)
        for kk in range(num_rot):
            i, j = int(pairs[kk, 0]), int(pairs[kk, 1])                   # .long() truncation
            th = float(thetas[kk])
            G = np.eye(Dh, dtype=np.float32)
            G[i, i] = math.cos(th)
            G[i, j] = -math.sin(th)
            G[j, i] = math.sin(th)
            G[j, j] = math.cos(th)
            R = R @ G
        R = R @ rot_mat
        # Fold the even/odd RoPE split + concat into selector matrices.
        E = np.zeros((Dh, Dh // 2), np.float32)
        O = np.zeros((Dh, Dh // 2), np.float32)
        for m in range(Dh // 2):
            E[2 * m, m] = 1.0
            O[2 * m + 1, m] = 1.0
        A = R @ np.concatenate([E, E], axis=1)
        Bm = R @ np.concatenate([O, O], axis=1)
        inv_freq = 1.0 / (float(base) ** (np.arange(0, Dh, 2, dtype=np.float32) / Dh))
        return {"A": jnp.asarray(A, jnp.float32), "B": jnp.asarray(Bm, jnp.float32),
                "inv_freq": jnp.asarray(inv_freq, jnp.float32), "n_head": H, "h_dim": Dh}

    def mha_p(rot_base):
        return {"query": linear_p(D, D, True),        # dead on this path
                "key": linear_p(D, D, False),         # dead on this path
                "value": linear_p(D, D, True),
                "out": linear_p(D, D, True),
                "positional_scaling": 1.0,            # dead on this path
                "rotary": rotary_p(rot_base)}         # dead on this path

    blocks = []
    for _ in range(L):
        attn = {
            "ln_local": ln_p(D), "ln_global": ln_p(D),
            # AdaptiveSpanAttention(n_state, n_head, max_span=1, max_rel_dist=10000, base=50)
            "local": {"max_span": 1, "span_scale": 1.0, "mha": mha_p(50)},
            "global": mha_p(10000),
            "projection": linear_p(2 * D, D, True),
            # HybridAttention.window_size == TextDecoder's max_rel_dist (positional quirk)
            "window_size": cfg["max_rel_dist"],
        }
        blocks.append({"attn": attn,
                       "attn_ln": ln_p(D),
                       "mlp_fc1": linear_p(D, 4 * D, True),
                       "mlp_fc2": linear_p(4 * D, D, True),
                       "mlp_ln": ln_p(D)})

    # LearnedSinusoidalEmbeddings buffer/parameter init
    position = np.arange(C, dtype=np.float32)[:, None]
    div_term = np.exp(np.arange(0, D, 2, dtype=np.float32) * -(math.log(10000.0) / D))
    feat = np.zeros((C, D), np.float32)
    feat[:, 0::2] = np.sin(position * div_term)
    feat[:, 1::2] = np.cos(position * div_term)

    return {"tok_emb": jax.random.normal(nk(), (V, D), jnp.float32) * 0.02,
            "pos_emb": jnp.asarray(feat),
            "rotary": rotary_p(cfg["base"]),
            "blocks": blocks,
            "ln": ln_p(D)}


def pack_params(params, cfg):
    """Fold + stack per-layer weights (bf16) for the fused layer/MLP-tile grid."""
    D, H = cfg["n_state"], cfg["n_head"]
    rot = params["rotary"]
    eye_h = np.eye(H, dtype=np.float32)
    a_blk = jnp.asarray(np.kron(eye_h, np.asarray(rot["A"])))   # per-head block-diag (D,D)
    b_blk = jnp.asarray(np.kron(eye_h, np.asarray(rot["B"])))

    wsq, vv, w1, b1, w2 = [], [], [], [], []
    for bp in params["blocks"]:
        at = bp["attn"]
        # The single-key reduction in the kernel requires adaptive span == 1.
        assert int(at["local"]["max_span"] * at["local"]["span_scale"]) == 1
        lm, gm = at["local"]["mha"], at["global"]
        wp_l = at["projection"]["w_t"][:D, :]
        wp_g = at["projection"]["w_t"][D:, :]
        # local branch: fold value->out (row mask sits between out and projection)
        w_loc = lm["value"]["w_t"] @ lm["out"]["w_t"]
        b_loc = lm["value"]["b"] @ lm["out"]["w_t"] + lm["out"]["b"]
        # global branch: fold value->out->projection-half, plus all its biases
        w_glb = gm["value"]["w_t"] @ gm["out"]["w_t"] @ wp_g
        b_glb = ((gm["value"]["b"] @ gm["out"]["w_t"] + gm["out"]["b"]) @ wp_g
                 + at["projection"]["b"])
        wsq.append(jnp.stack([w_loc, wp_l, w_glb]).astype(jnp.bfloat16))
        vv.append(jnp.stack([bp["attn_ln"]["g"], bp["attn_ln"]["b"],
                             at["ln_local"]["g"], at["ln_local"]["b"],
                             at["ln_global"]["g"], at["ln_global"]["b"],
                             b_loc, b_glb,
                             bp["mlp_ln"]["g"], bp["mlp_ln"]["b"],
                             bp["mlp_fc2"]["b"]]))
        w1.append(bp["mlp_fc1"]["w_t"].astype(jnp.bfloat16))
        b1.append(bp["mlp_fc1"]["b"][None, :])
        w2.append(bp["mlp_fc2"]["w_t"].astype(jnp.bfloat16))

    # Tied vocab projection: transpose + lane-pad + bf16 once (not per forward).
    V = params["tok_emb"].shape[0]
    vp = ((V + 127) // 128) * 128
    w_vocab = jnp.transpose(params["tok_emb"])
    if vp != V:
        w_vocab = jnp.pad(w_vocab, ((0, 0), (0, vp - V)))
    # TODO(synk): for peak MXU utilization D (and the head dim) should be padded
    # to 128/256 multiples; not done here to keep demo shapes faithful.
    return {"A_blk": a_blk, "B_blk": b_blk,
            "Wsq": jnp.stack(wsq), "Vvec": jnp.stack(vv),
            "W1": jnp.stack(w1), "b1": jnp.stack(b1), "W2": jnp.stack(w2),
            "Wvocab": w_vocab.astype(jnp.bfloat16), "vocab_size": V}


# -----------------------------------------------------------------------------
if __name__ == "__main__":
    cfg = dict(vocab_size=64, n_ctx=8, n_state=32, n_head=4, n_layer=2,
               window_size=4, max_rel_dist=4, base=10000)
    key = jax.random.PRNGKey(0)
    kp, kt, ka = jax.random.split(key, 3)
    params = init_params(kp, cfg)
    packed = pack_params(params, cfg)

    B, S = 2, cfg["n_ctx"]
    tokens = jax.random.randint(kt, (B, S), 0, cfg["vocab_size"], dtype=jnp.int32)
    xa = jax.random.normal(ka, (B, S, cfg["n_state"]), jnp.float32)  # encoder output (dtype src)

    fwd = jax.jit(lambda t, a: text_decoder_forward(t, a, params, packed, cfg))
    logits = fwd(tokens, xa)
    jax.block_until_ready(logits)

    assert logits.shape == (B, S, cfg["vocab_size"])
    assert logits.dtype == jnp.float32
    assert bool(jnp.all(jnp.isfinite(logits)))
    print("KERNEL_OK")
</pallas_src>

<mosaic_0001>
module attributes {stable_mosaic.version = 11 : i64} {
  func.func @_logits_kernel(%arg0: i32, %arg1: memref<16x32xf32, #tpu.memory_space<vmem>>, %arg2: memref<32x128xbf16, #tpu.memory_space<vmem>>, %arg3: memref<16x128xf32, #tpu.memory_space<vmem>>) attributes {dimension_semantics = [#tpu.dimension_semantics<parallel>], iteration_bounds = array<i64: 1>, scalar_prefetch = 0 : i64, scratch_operands = 0 : i64, tpu.core_type = #tpu.core_type<tc>, window_params = [{pipeline_mode = #tpu.pipeline_mode<synchronous>, transform_indices = @transform_0, window_bounds = array<i64: 16, 32>}, {transform_indices = @transform_1, window_bounds = array<i64: 32, 128>}, {transform_indices = @transform_2, window_bounds = array<i64: 16, 128>}]} {
    %c0 = arith.constant 0 : index
    %c0_0 = arith.constant 0 : index
    %0 = vector.load %arg1[%c0, %c0_0] : memref<16x32xf32, #tpu.memory_space<vmem>>, vector<16x32xf32>
    %1 = arith.truncf %0 : vector<16x32xf32> to vector<16x32xbf16>
    %c0_1 = arith.constant 0 : index
    %c0_2 = arith.constant 0 : index
    %2 = vector.load %arg2[%c0_1, %c0_2] : memref<32x128xbf16, #tpu.memory_space<vmem>>, vector<32x128xbf16>
    %cst = arith.constant dense<0.000000e+00> : vector<16x128xf32>
    %3 = tpu.matmul %1, %2, %cst {dimension_numbers = #tpu.dot_dimension_numbers<[1], [0], [0], [1], [0, 0, 1, 1], [], []>} : vector<16x32xbf16>, vector<32x128xbf16>, vector<16x128xf32> -> vector<16x128xf32>
    %c0_3 = arith.constant 0 : index
    %c0_4 = arith.constant 0 : index
    %4 = vector.load %arg3[%c0_3, %c0_4] : memref<16x128xf32, #tpu.memory_space<vmem>>, vector<16x128xf32>
    tpu.vector_store %arg3[%c0_3, %c0_4], %3 {strides = array<i32>} : memref<16x128xf32, #tpu.memory_space<vmem>>, vector<16x128xf32>,
    return
  }
  func.func @transform_0(%arg0: i32) -> (i32, i32) {
    %c0_i32 = arith.constant 0 : i32
    %c0_i32_0 = arith.constant 0 : i32
    %c0_i32_1 = arith.constant 0 : i32
    return %c0_i32, %c0_i32_0 : i32, i32
  }
  func.func @transform_1(%arg0: i32) -> (i32, i32) {
    %c0_i32 = arith.constant 0 : i32
    %c0_i32_0 = arith.constant 0 : i32
    return %c0_i32, %arg0 : i32, i32
  }
  func.func @transform_2(%arg0: i32) -> (i32, i32) {
    %c0_i32 = arith.constant 0 : i32
    %c0_i32_0 = arith.constant 0 : i32
    return %c0_i32, %arg0 : i32, i32
  }
}

module attributes {stable_mosaic.version = 11 : i64} {
  func.func @_decoder_blocks_kernel(%arg0: i32, %arg1: i32, %arg2: memref<16x32xf32, #tpu.memory_space<vmem>>, %arg3: memref<1x3x32x32xbf16, #tpu.memory_space<vmem>>, %arg4: memref<1x11x32xf32, #tpu.memory_space<vmem>>, %arg5: memref<1x32x128xbf16, #tpu.memory_space<vmem>>, %arg6: memref<1x1x128xf32, #tpu.memory_space<vmem>>, %arg7: memref<1x128x32xbf16, #tpu.memory_space<vmem>>, %arg8: memref<1x32xf32, #tpu.memory_space<vmem>>, %arg9: memref<1x32xf32, #tpu.memory_space<vmem>>, %arg10: memref<16x32xf32, #tpu.memory_space<vmem>>, %arg11: memref<16x32xf32, #tpu.memory_space<vmem>>, %arg12: memref<16x32xf32, #tpu.memory_space<vmem>>) attributes {dimension_semantics = [#tpu.dimension_semantics<arbitrary>, #tpu.dimension_semantics<arbitrary>], iteration_bounds = array<i64: 2, 1>, scalar_prefetch = 0 : i64, scratch_operands = 2 : i64, tpu.core_type = #tpu.core_type<tc>, window_params = [{pipeline_mode = #tpu.pipeline_mode<synchronous>, transform_indices = @transform_0, window_bounds = array<i64: 16, 32>}, {transform_indices = @transform_1, window_bounds = array<i64: 1, 3, 32, 32>}, {transform_indices = @transform_2, window_bounds = array<i64: 1, 11, 32>}, {transform_indices = @transform_3, window_bounds = array<i64: 1, 32, 128>}, {transform_indices = @transform_4, window_bounds = array<i64: 1, 1, 128>}, {transform_indices = @transform_5, window_bounds = array<i64: 1, 128, 32>}, {pipeline_mode = #tpu.pipeline_mode<synchronous>, transform_indices = @transform_6, window_bounds = array<i64: 1, 32>}, {pipeline_mode = #tpu.pipeline_mode<synchronous>, transform_indices = @transform_7, window_bounds = array<i64: 1, 32>}, {pipeline_mode = #tpu.pipeline_mode<synchronous>, transform_indices = @transform_8, window_bounds = array<i64: 16, 32>}]} {
    %c0 = arith.constant 0 : index
    %c0_0 = arith.constant 0 : index
    %c0_1 = arith.constant 0 : index
    %0 = vector.load %arg4[%c0, %c0_0, %c0_1] : memref<1x11x32xf32, #tpu.memory_space<vmem>>, vector<1x11x32xf32>
    %1 = vector.shape_cast %0 : vector<1x11x32xf32> to vector<11x32xf32>
    %c0_2 = arith.constant 0 : index
    %c0_3 = arith.constant 0 : index
    %c0_4 = arith.constant 0 : index
    %c0_5 = arith.constant 0 : index
    %2 = vector.load %arg3[%c0_2, %c0_3, %c0_4, %c0_5] : memref<1x3x32x32xbf16, #tpu.memory_space<vmem>>, vector<1x3x32x32xbf16>
    %3 = vector.shape_cast %2 : vector<1x3x32x32xbf16> to vector<3x32x32xbf16>
    %c0_i32 = arith.constant 0 : i32
    %4 = arith.cmpi eq, %arg0, %c0_i32 : i32
    %c0_i32_6 = arith.constant 0 : i32
    %5 = arith.cmpi eq, %arg1, %c0_i32_6 : i32
    %6 = arith.andi %4, %5 : i1
    %7 = arith.extui %6 : i1 to i32
    %c0_i32_7 = arith.constant 0 : i32
    %8 = arith.cmpi ne, %7, %c0_i32_7 : i32
    scf.if %8 {
      %c0_43 = arith.constant 0 : index
      %c0_44 = arith.constant 0 : index
      %73 = vector.load %arg2[%c0_43, %c0_44] : memref<16x32xf32, #tpu.memory_space<vmem>>, vector<16x32xf32>
      %c0_45 = arith.constant 0 : index
      %c0_46 = arith.constant 0 : index
      %74 = vector.load %arg11[%c0_45, %c0_46] : memref<16x32xf32, #tpu.memory_space<vmem>>, vector<16x32xf32>
      tpu.vector_store %arg11[%c0_45, %c0_46], %73 {strides = array<i32>} : memref<16x32xf32, #tpu.memory_space<vmem>>, vector<16x32xf32>,
      %cst_47 = arith.constant 0.000000e+00 : f32
      %75 = vector.broadcast %cst_47 : f32 to vector<16x32xf32>
      %c0_48 = arith.constant 0 : index
      %c0_49 = arith.constant 0 : index
      %76 = vector.load %arg10[%c0_48, %c0_49] : memref<16x32xf32, #tpu.memory_space<vmem>>, vector<16x32xf32>
      tpu.vector_store %arg10[%c0_48, %c0_49], %75 {strides = array<i32>} : memref<16x32xf32, #tpu.memory_space<vmem>>, vector<16x32xf32>,
    } else {
    }
    %c0_i32_8 = arith.constant 0 : i32
    %9 = arith.cmpi eq, %arg1, %c0_i32_8 : i32
    %10 = arith.extui %9 : i1 to i32
    %c0_i32_9 = arith.constant 0 : i32
    %11 = arith.cmpi ne, %10, %c0_i32_9 : i32
    scf.if %11 {
      %c0_43 = arith.constant 0 : index
      %c0_44 = arith.constant 0 : index
      %73 = vector.load %arg11[%c0_43, %c0_44] : memref<16x32xf32, #tpu.memory_space<vmem>>, vector<16x32xf32>
      %74 = vector.extract_strided_slice %73 {offsets = [0, 0], sizes = [8, 32], strides = [1, 1]} : vector<16x32xf32> to vector<8x32xf32>
      %75 = vector.extract_strided_slice %1 {offsets = [0, 0], sizes = [1, 32], strides = [1, 1]} : vector<11x32xf32> to vector<1x32xf32>
      %76 = vector.extract_strided_slice %1 {offsets = [1, 0], sizes = [1, 32], strides = [1, 1]} : vector<11x32xf32> to vector<1x32xf32>
      %cst_45 = arith.constant dense<0.000000e+00> : vector<8xf32>
      %77 = vector.multi_reduction <add>, %74, %cst_45 [1] : vector<8x32xf32> to vector<8xf32>
      %78 = vector.shape_cast %77 : vector<8xf32> to vector<8x1xf32>
      %cst_46 = arith.constant 3.200000e+01 : f32
      %79 = vector.broadcast %cst_46 : f32 to vector<8x1xf32>
      %80 = arith.divf %78, %79 : vector<8x1xf32>
      %81 = vector.broadcast %80 : vector<8x1xf32> to vector<8x32xf32>
      %82 = arith.subf %74, %81 : vector<8x32xf32>
      %83 = arith.mulf %82, %82 : vector<8x32xf32>
      %cst_47 = arith.constant dense<0.000000e+00> : vector<8xf32>
      %84 = vector.multi_reduction <add>, %83, %cst_47 [1] : vector<8x32xf32> to vector<8xf32>
      %85 = vector.shape_cast %84 : vector<8xf32> to vector<8x1xf32>
      %cst_48 = arith.constant 3.200000e+01 : f32
      %86 = vector.broadcast %cst_48 : f32 to vector<8x1xf32>
      %87 = arith.divf %85, %86 : vector<8x1xf32>
      %cst_49 = arith.constant 9.99999974E-6 : f32
      %88 = vector.broadcast %cst_49 : f32 to vector<8x1xf32>
      %89 = arith.addf %87, %88 : vector<8x1xf32>
      %90 = math.rsqrt %89 : vector<8x1xf32>
      %91 = vector.broadcast %90 : vector<8x1xf32> to vector<8x32xf32>
      %92 = arith.mulf %82, %91 : vector<8x32xf32>
      %93 = vector.broadcast %75 : vector<1x32xf32> to vector<8x32xf32>
      %94 = arith.mulf %92, %93 : vector<8x32xf32>
      %95 = vector.broadcast %76 : vector<1x32xf32> to vector<8x32xf32>
      %96 = arith.addf %94, %95 : vector<8x32xf32>
      %97 = vector.extract_strided_slice %1 {offsets = [2, 0], sizes = [1, 32], strides = [1, 1]} : vector<11x32xf32> to vector<1x32xf32>
      %98 = vector.extract_strided_slice %1 {offsets = [3, 0], sizes = [1, 32], strides = [1, 1]} : vector<11x32xf32> to vector<1x32xf32>
      %cst_50 = arith.constant dense<0.000000e+00> : vector<8xf32>
      %99 = vector.multi_reduction <add>, %96, %cst_50 [1] : vector<8x32xf32> to vector<8xf32>
      %100 = vector.shape_cast %99 : vector<8xf32> to vector<8x1xf32>
      %cst_51 = arith.constant 3.200000e+01 : f32
      %101 = vector.broadcast %cst_51 : f32 to vector<8x1xf32>
      %102 = arith.divf %100, %101 : vector<8x1xf32>
      %103 = vector.broadcast %102 : vector<8x1xf32> to vector<8x32xf32>
      %104 = arith.subf %96, %103 : vector<8x32xf32>
      %105 = arith.mulf %104, %104 : vector<8x32xf32>
      %cst_52 = arith.constant dense<0.000000e+00> : vector<8xf32>
      %106 = vector.multi_reduction <add>, %105, %cst_52 [1] : vector<8x32xf32> to vector<8xf32>
      %107 = vector.shape_cast %106 : vector<8xf32> to vector<8x1xf32>
      %cst_53 = arith.constant 3.200000e+01 : f32
      %108 = vector.broadcast %cst_53 : f32 to vector<8x1xf32>
      %109 = arith.divf %107, %108 : vector<8x1xf32>
      %cst_54 = arith.constant 9.99999974E-6 : f32
      %110 = vector.broadcast %cst_54 : f32 to vector<8x1xf32>
      %111 = arith.addf %109, %110 : vector<8x1xf32>
      %112 = math.rsqrt %111 : vector<8x1xf32>
      %113 = vector.broadcast %112 : vector<8x1xf32> to vector<8x32xf32>
      %114 = arith.mulf %104, %113 : vector<8x32xf32>
      %115 = vector.broadcast %97 : vector<1x32xf32> to vector<8x32xf32>
      %116 = arith.mulf %114, %115 : vector<8x32xf32>
      %117 = vector.broadcast %98 : vector<1x32xf32> to vector<8x32xf32>
      %118 = arith.addf %116, %117 : vector<8x32xf32>
      %119 = arith.truncf %118 : vector<8x32xf32> to vector<8x32xbf16>
      %120 = vector.extract_strided_slice %1 {offsets = [4, 0], sizes = [1, 32], strides = [1, 1]} : vector<11x32xf32> to vector<1x32xf32>
      %121 = vector.extract_strided_slice %1 {offsets = [5, 0], sizes = [1, 32], strides = [1, 1]} : vector<11x32xf32> to vector<1x32xf32>
      %cst_55 = arith.constant dense<0.000000e+00> : vector<8xf32>
      %122 = vector.multi_reduction <add>, %96, %cst_55 [1] : vector<8x32xf32> to vector<8xf32>
      %123 = vector.shape_cast %122 : vector<8xf32> to vector<8x1xf32>
      %cst_56 = arith.constant 3.200000e+01 : f32
      %124 = vector.broadcast %cst_56 : f32 to vector<8x1xf32>
      %125 = arith.divf %123, %124 : vector<8x1xf32>
      %126 = vector.broadcast %125 : vector<8x1xf32> to vector<8x32xf32>
      %127 = arith.subf %96, %126 : vector<8x32xf32>
      %128 = arith.mulf %127, %127 : vector<8x32xf32>
      %cst_57 = arith.constant dense<0.000000e+00> : vector<8xf32>
      %129 = vector.multi_reduction <add>, %128, %cst_57 [1] : vector<8x32xf32> to vector<8xf32>
      %130 = vector.shape_cast %129 : vector<8xf32> to vector<8x1xf32>
      %cst_58 = arith.constant 3.200000e+01 : f32
      %131 = vector.broadcast %cst_58 : f32 to vector<8x1xf32>
      %132 = arith.divf %130, %131 : vector<8x1xf32>
      %cst_59 = arith.constant 9.99999974E-6 : f32
      %133 = vector.broadcast %cst_59 : f32 to vector<8x1xf32>
      %134 = arith.addf %132, %133 : vector<8x1xf32>
      %135 = math.rsqrt %134 : vector<8x1xf32>
      %136 = vector.broadcast %135 : vector<8x1xf32> to vector<8x32xf32>
      %137 = arith.mulf %127, %136 : vector<8x32xf32>
      %138 = vector.broadcast %120 : vector<1x32xf32> to vector<8x32xf32>
      %139 = arith.mulf %137, %138 : vector<8x32xf32>
      %140 = vector.broadcast %121 : vector<1x32xf32> to vector<8x32xf32>
      %141 = arith.addf %139, %140 : vector<8x32xf32>
      %142 = arith.truncf %141 : vector<8x32xf32> to vector<8x32xbf16>
      %143 = vector.extract_strided_slice %3 {offsets = [0, 0, 0], sizes = [1, 32, 32], strides = [1, 1, 1]} : vector<3x32x32xbf16> to vector<1x32x32xbf16>
      %144 = vector.shape_cast %143 : vector<1x32x32xbf16> to vector<32x32xbf16>
      %cst_60 = arith.constant dense<0.000000e+00> : vector<8x32xf32>
      %145 = tpu.matmul %119, %144, %cst_60 {dimension_numbers = #tpu.dot_dimension_numbers<[1], [0], [0], [1], [0, 0, 1, 1], [], []>} : vector<8x32xbf16>, vector<32x32xbf16>, vector<8x32xf32> -> vector<8x32xf32>
      %146 = vector.extract_strided_slice %1 {offsets = [6, 0], sizes = [1, 32], strides = [1, 1]} : vector<11x32xf32> to vector<1x32xf32>
      %147 = vector.broadcast %146 : vector<1x32xf32> to vector<8x32xf32>
      %148 = arith.addf %145, %147 : vector<8x32xf32>
      %149 = tpu.iota {dimensions = array<i32: 0>} : vector<8x1xi32>
      %c2_i32 = arith.constant 2 : i32
      %150 = vector.broadcast %c2_i32 : i32 to vector<8x1xi32>
      %151 = arith.cmpi slt, %149, %150 : vector<8x1xi32>
      %cst_61 = arith.constant 0.000000e+00 : f32
      %152 = vector.shape_cast %151 : vector<8x1xi1> to vector<8x1xi1>
      %153 = vector.broadcast %152 : vector<8x1xi1> to vector<8x32xi1>
      %154 = vector.broadcast %cst_61 : f32 to vector<8x32xf32>
      %155 = arith.select %153, %148, %154 : vector<8x32xi1>, vector<8x32xf32>
      %156 = arith.truncf %155 : vector<8x32xf32> to vector<8x32xbf16>
      %157 = vector.extract_strided_slice %3 {offsets = [1, 0, 0], sizes = [1, 32, 32], strides = [1, 1, 1]} : vector<3x32x32xbf16> to vector<1x32x32xbf16>
      %158 = vector.shape_cast %157 : vector<1x32x32xbf16> to vector<32x32xbf16>
      %cst_62 = arith.constant dense<0.000000e+00> : vector<8x32xf32>
      %159 = tpu.matmul %156, %158, %cst_62 {dimension_numbers = #tpu.dot_dimension_numbers<[1], [0], [0], [1], [0, 0, 1, 1], [], []>} : vector<8x32xbf16>, vector<32x32xbf16>, vector<8x32xf32> -> vector<8x32xf32>
      %160 = vector.extract_strided_slice %3 {offsets = [2, 0, 0], sizes = [1, 32, 32], strides = [1, 1, 1]} : vector<3x32x32xbf16> to vector<1x32x32xbf16>
      %161 = vector.shape_cast %160 : vector<1x32x32xbf16> to vector<32x32xbf16>
      %cst_63 = arith.constant dense<0.000000e+00> : vector<8x32xf32>
      %162 = tpu.matmul %142, %161, %cst_63 {dimension_numbers = #tpu.dot_dimension_numbers<[1], [0], [0], [1], [0, 0, 1, 1], [], []>} : vector<8x32xbf16>, vector<32x32xbf16>, vector<8x32xf32> -> vector<8x32xf32>
      %163 = arith.addf %159, %162 : vector<8x32xf32>
      %164 = vector.extract_strided_slice %1 {offsets = [7, 0], sizes = [1, 32], strides = [1, 1]} : vector<11x32xf32> to vector<1x32xf32>
      %165 = vector.broadcast %164 : vector<1x32xf32> to vector<8x32xf32>
      %166 = arith.addf %163, %165 : vector<8x32xf32>
      %167 = vector.shape_cast %73 : vector<16x32xf32> to vector<2x8x32xf32>
      %168 = vector.shape_cast %166 : vector<8x32xf32> to vector<1x8x32xf32>
      %169 = vector.broadcast %168 : vector<1x8x32xf32> to vector<2x8x32xf32>
      %170 = arith.addf %167, %169 : vector<2x8x32xf32>
      %171 = vector.shape_cast %170 : vector<2x8x32xf32> to vector<16x32xf32>
      %172 = vector.extract_strided_slice %1 {offsets = [8, 0], sizes = [1, 32], strides = [1, 1]} : vector<11x32xf32> to vector<1x32xf32>
      %173 = vector.extract_strided_slice %1 {offsets = [9, 0], sizes = [1, 32], strides = [1, 1]} : vector<11x32xf32> to vector<1x32xf32>
      %cst_64 = arith.constant dense<0.000000e+00> : vector<16xf32>
      %174 = vector.multi_reduction <add>, %171, %cst_64 [1] : vector<16x32xf32> to vector<16xf32>
      %175 = vector.shape_cast %174 : vector<16xf32> to vector<16x1xf32>
      %cst_65 = arith.constant 3.200000e+01 : f32
      %176 = vector.broadcast %cst_65 : f32 to vector<16x1xf32>
      %177 = arith.divf %175, %176 : vector<16x1xf32>
      %178 = vector.broadcast %177 : vector<16x1xf32> to vector<16x32xf32>
      %179 = arith.subf %171, %178 : vector<16x32xf32>
      %180 = arith.mulf %179, %179 : vector<16x32xf32>
      %cst_66 = arith.constant dense<0.000000e+00> : vector<16xf32>
      %181 = vector.multi_reduction <add>, %180, %cst_66 [1] : vector<16x32xf32> to vector<16xf32>
      %182 = vector.shape_cast %181 : vector<16xf32> to vector<16x1xf32>
      %cst_67 = arith.constant 3.200000e+01 : f32
      %183 = vector.broadcast %cst_67 : f32 to vector<16x1xf32>
      %184 = arith.divf %182, %183 : vector<16x1xf32>
      %cst_68 = arith.constant 9.99999974E-6 : f32
      %185 = vector.broadcast %cst_68 : f32 to vector<16x1xf32>
      %186 = arith.addf %184, %185 : vector<16x1xf32>
      %187 = math.rsqrt %186 : vector<16x1xf32>
      %188 = vector.broadcast %187 : vector<16x1xf32> to vector<16x32xf32>
      %189 = arith.mulf %179, %188 : vector<16x32xf32>
      %190 = vector.broadcast %172 : vector<1x32xf32> to vector<16x32xf32>
      %191 = arith.mulf %189, %190 : vector<16x32xf32>
      %192 = vector.broadcast %173 : vector<1x32xf32> to vector<16x32xf32>
      %193 = arith.addf %191, %192 : vector<16x32xf32>
      %c0_69 = arith.constant 0 : index
      %c0_70 = arith.constant 0 : index
      %194 = vector.load %arg12[%c0_69, %c0_70] : memref<16x32xf32, #tpu.memory_space<vmem>>, vector<16x32xf32>
      tpu.vector_store %arg12[%c0_69, %c0_70], %193 {strides = array<i32>} : memref<16x32xf32, #tpu.memory_space<vmem>>, vector<16x32xf32>,
      %195 = vector.extract_strided_slice %1 {offsets = [10, 0], sizes = [1, 32], strides = [1, 1]} : vector<11x32xf32> to vector<1x32xf32>
      %196 = vector.broadcast %195 : vector<1x32xf32> to vector<16x32xf32>
      %197 = arith.addf %171, %196 : vector<16x32xf32>
      %c0_71 = arith.constant 0 : index
      %c0_72 = arith.constant 0 : index
      %198 = vector.load %arg11[%c0_71, %c0_72] : memref<16x32xf32, #tpu.memory_space<vmem>>, vector<16x32xf32>
      tpu.vector_store %arg11[%c0_71, %c0_72], %197 {strides = array<i32>} : memref<16x32xf32, #tpu.memory_space<vmem>>, vector<16x32xf32>,
    } else {
    }
    %c0_10 = arith.constant 0 : index
    %c0_11 = arith.constant 0 : index
    %12 = vector.load %arg12[%c0_10, %c0_11] : memref<16x32xf32, #tpu.memory_space<vmem>>, vector<16x32xf32>
    %13 = arith.truncf %12 : vector<16x32xf32> to vector<16x32xbf16>
    %c0_12 = arith.constant 0 : index
    %c0_13 = arith.constant 0 : index
    %c0_14 = arith.constant 0 : index
    %14 = vector.load %arg5[%c0_12, %c0_13, %c0_14] : memref<1x32x128xbf16, #tpu.memory_space<vmem>>, vector<1x32x128xbf16>
    %15 = vector.shape_cast %14 : vector<1x32x128xbf16> to vector<32x128xbf16>
    %cst = arith.constant dense<0.000000e+00> : vector<16x128xf32>
    %16 = tpu.matmul %13, %15, %cst {dimension_numbers = #tpu.dot_dimension_numbers<[1], [0], [0], [1], [0, 0, 1, 1], [], []>} : vector<16x32xbf16>, vector<32x128xbf16>, vector<16x128xf32> -> vector<16x128xf32>
    %c0_15 = arith.constant 0 : index
    %c0_16 = arith.constant 0 : index
    %c0_17 = arith.constant 0 : index
    %17 = vector.load %arg6[%c0_15, %c0_16, %c0_17] : memref<1x1x128xf32, #tpu.memory_space<vmem>>, vector<1x1x128xf32>
    %18 = vector.shape_cast %17 : vector<1x1x128xf32> to vector<1x128xf32>
    %19 = vector.broadcast %18 : vector<1x128xf32> to vector<16x128xf32>
    %20 = arith.addf %16, %19 : vector<16x128xf32>
    %cst_18 = arith.constant 5.000000e-01 : f32
    %21 = vector.broadcast %cst_18 : f32 to vector<16x128xf32>
    %22 = arith.mulf %20, %21 : vector<16x128xf32>
    %cst_19 = arith.constant 0.707106769 : f32
    %23 = vector.broadcast %cst_19 : f32 to vector<16x128xf32>
    %24 = arith.mulf %20, %23 : vector<16x128xf32>
    %25 = math.absf %24 : vector<16x128xf32>
    %cst_20 = arith.constant 0.327591091 : f32
    %26 = vector.broadcast %cst_20 : f32 to vector<16x128xf32>
    %27 = arith.mulf %26, %25 : vector<16x128xf32>
    %cst_21 = arith.constant 1.000000e+00 : f32
    %28 = vector.broadcast %cst_21 : f32 to vector<16x128xf32>
    %29 = arith.addf %28, %27 : vector<16x128xf32>
    %cst_22 = arith.constant 1.000000e+00 : f32
    %30 = vector.broadcast %cst_22 : f32 to vector<16x128xf32>
    %31 = arith.divf %30, %29 : vector<16x128xf32>
    %cst_23 = arith.constant 1.06140542 : f32
    %32 = vector.broadcast %cst_23 : f32 to vector<16x128xf32>
    %33 = arith.mulf %32, %31 : vector<16x128xf32>
    %cst_24 = arith.constant -1.45315206 : f32
    %34 = vector.broadcast %cst_24 : f32 to vector<16x128xf32>
    %35 = arith.addf %33, %34 : vector<16x128xf32>
    %36 = arith.mulf %35, %31 : vector<16x128xf32>
    %cst_25 = arith.constant 1.42141378 : f32
    %37 = vector.broadcast %cst_25 : f32 to vector<16x128xf32>
    %38 = arith.addf %36, %37 : vector<16x128xf32>
    %39 = arith.mulf %38, %31 : vector<16x128xf32>
    %cst_26 = arith.constant -0.284496725 : f32
    %40 = vector.broadcast %cst_26 : f32 to vector<16x128xf32>
    %41 = arith.addf %39, %40 : vector<16x128xf32>
    %42 = arith.mulf %41, %31 : vector<16x128xf32>
    %cst_27 = arith.constant 0.254829586 : f32
    %43 = vector.broadcast %cst_27 : f32 to vector<16x128xf32>
    %44 = arith.addf %42, %43 : vector<16x128xf32>
    %45 = arith.mulf %44, %31 : vector<16x128xf32>
    %cst_28 = arith.constant 0.000000e+00 : f32
    %46 = vector.broadcast %cst_28 : f32 to vector<16x128xf32>
    %47 = arith.subf %46, %25 : vector<16x128xf32>
    %48 = arith.mulf %47, %25 : vector<16x128xf32>
    %49 = math.exp %48 : vector<16x128xf32>
    %50 = arith.mulf %45, %49 : vector<16x128xf32>
    %cst_29 = arith.constant 1.000000e+00 : f32
    %51 = vector.broadcast %cst_29 : f32 to vector<16x128xf32>
    %52 = arith.subf %51, %50 : vector<16x128xf32>
    %cst_30 = arith.constant 0.000000e+00 : f32
    %53 = vector.broadcast %cst_30 : f32 to vector<16x128xf32>
    %54 = arith.cmpf oge, %24, %53 : vector<16x128xf32>
    %cst_31 = arith.constant 0.000000e+00 : f32
    %55 = vector.broadcast %cst_31 : f32 to vector<16x128xf32>
    %56 = arith.subf %55, %52 : vector<16x128xf32>
    %57 = arith.select %54, %52, %56 : vector<16x128xi1>, vector<16x128xf32>
    %cst_32 = arith.constant 1.000000e+00 : f32
    %58 = vector.broadcast %cst_32 : f32 to vector<16x128xf32>
    %59 = arith.addf %58, %57 : vector<16x128xf32>
    %60 = arith.mulf %22, %59 : vector<16x128xf32>
    %c0_33 = arith.constant 0 : index
    %c0_34 = arith.constant 0 : index
    %61 = vector.load %arg11[%c0_33, %c0_34] : memref<16x32xf32, #tpu.memory_space<vmem>>, vector<16x32xf32>
    %62 = arith.truncf %60 : vector<16x128xf32> to vector<16x128xbf16>
    %c0_35 = arith.constant 0 : index
    %c0_36 = arith.constant 0 : index
    %c0_37 = arith.constant 0 : index
    %63 = vector.load %arg7[%c0_35, %c0_36, %c0_37] : memref<1x128x32xbf16, #tpu.memory_space<vmem>>, vector<1x128x32xbf16>
    %64 = vector.shape_cast %63 : vector<1x128x32xbf16> to vector<128x32xbf16>
    %cst_38 = arith.constant dense<0.000000e+00> : vector<16x32xf32>
    %65 = tpu.matmul %62, %64, %cst_38 {dimension_numbers = #tpu.dot_dimension_numbers<[1], [0], [0], [1], [0, 0, 1, 1], [], []>} : vector<16x128xbf16>, vector<128x32xbf16>, vector<16x32xf32> -> vector<16x32xf32>
    %66 = arith.addf %61, %65 : vector<16x32xf32>
    %c0_39 = arith.constant 0 : index
    %c0_40 = arith.constant 0 : index
    %67 = vector.load %arg11[%c0_39, %c0_40] : memref<16x32xf32, #tpu.memory_space<vmem>>, vector<16x32xf32>
    tpu.vector_store %arg11[%c0_39, %c0_40], %66 {strides = array<i32>} : memref<16x32xf32, #tpu.memory_space<vmem>>, vector<16x32xf32>,
    %c1_i32 = arith.constant 1 : i32
    %68 = arith.cmpi eq, %arg0, %c1_i32 : i32
    %c0_i32_41 = arith.constant 0 : i32
    %69 = arith.cmpi eq, %arg1, %c0_i32_41 : i32
    %70 = arith.andi %68, %69 : i1
    %71 = arith.extui %70 : i1 to i32
    %c0_i32_42 = arith.constant 0 : i32
    %72 = arith.cmpi ne, %71, %c0_i32_42 : i32
    scf.if %72 {
      %c0_43 = arith.constant 0 : index
      %c0_44 = arith.constant 0 : index
      %73 = vector.load %arg11[%c0_43, %c0_44] : memref<16x32xf32, #tpu.memory_space<vmem>>, vector<16x32xf32>
      %c0_45 = arith.constant 0 : index
      %c0_46 = arith.constant 0 : index
      %74 = vector.load %arg8[%c0_45, %c0_46] : memref<1x32xf32, #tpu.memory_space<vmem>>, vector<1x32xf32>
      %c0_47 = arith.constant 0 : index
      %c0_48 = arith.constant 0 : index
      %75 = vector.load %arg9[%c0_47, %c0_48] : memref<1x32xf32, #tpu.memory_space<vmem>>, vector<1x32xf32>
      %cst_49 = arith.constant dense<0.000000e+00> : vector<16xf32>
      %76 = vector.multi_reduction <add>, %73, %cst_49 [1] : vector<16x32xf32> to vector<16xf32>
      %77 = vector.shape_cast %76 : vector<16xf32> to vector<16x1xf32>
      %cst_50 = arith.constant 3.200000e+01 : f32
      %78 = vector.broadcast %cst_50 : f32 to vector<16x1xf32>
      %79 = arith.divf %77, %78 : vector<16x1xf32>
      %80 = vector.broadcast %79 : vector<16x1xf32> to vector<16x32xf32>
      %81 = arith.subf %73, %80 : vector<16x32xf32>
      %82 = arith.mulf %81, %81 : vector<16x32xf32>
      %cst_51 = arith.constant dense<0.000000e+00> : vector<16xf32>
      %83 = vector.multi_reduction <add>, %82, %cst_51 [1] : vector<16x32xf32> to vector<16xf32>
      %84 = vector.shape_cast %83 : vector<16xf32> to vector<16x1xf32>
      %cst_52 = arith.constant 3.200000e+01 : f32
      %85 = vector.broadcast %cst_52 : f32 to vector<16x1xf32>
      %86 = arith.divf %84, %85 : vector<16x1xf32>
      %cst_53 = arith.constant 9.99999974E-6 : f32
      %87 = vector.broadcast %cst_53 : f32 to vector<16x1xf32>
      %88 = arith.addf %86, %87 : vector<16x1xf32>
      %89 = math.rsqrt %88 : vector<16x1xf32>
      %90 = vector.broadcast %89 : vector<16x1xf32> to vector<16x32xf32>
      %91 = arith.mulf %81, %90 : vector<16x32xf32>
      %92 = vector.broadcast %74 : vector<1x32xf32> to vector<16x32xf32>
      %93 = arith.mulf %91, %92 : vector<16x32xf32>
      %94 = vector.broadcast %75 : vector<1x32xf32> to vector<16x32xf32>
      %95 = arith.addf %93, %94 : vector<16x32xf32>
      %c0_54 = arith.constant 0 : index
      %c0_55 = arith.constant 0 : index
      %96 = vector.load %arg10[%c0_54, %c0_55] : memref<16x32xf32, #tpu.memory_space<vmem>>, vector<16x32xf32>
      tpu.vector_store %arg10[%c0_54, %c0_55], %95 {strides = array<i32>} : memref<16x32xf32, #tpu.memory_space<vmem>>, vector<16x32xf32>,
    } else {
    }
    return
  }
  func.func @transform_0(%arg0: i32, %arg1: i32) -> (i32, i32) {
    %c0_i32 = arith.constant 0 : i32
    %c0_i32_0 = arith.constant 0 : i32
    %c0_i32_1 = arith.constant 0 : i32
    return %c0_i32, %c0_i32_0 : i32, i32
  }
  func.func @transform_1(%arg0: i32, %arg1: i32) -> (i32, i32, i32, i32) {
    %c0_i32 = arith.constant 0 : i32
    %c0_i32_0 = arith.constant 0 : i32
    %c0_i32_1 = arith.constant 0 : i32
    %c0_i32_2 = arith.constant 0 : i32
    return %arg0, %c0_i32, %c0_i32_0, %c0_i32_1 : i32, i32, i32, i32
  }
  func.func @transform_2(%arg0: i32, %arg1: i32) -> (i32, i32, i32) {
    %c0_i32 = arith.constant 0 : i32
    %c0_i32_0 = arith.constant 0 : i32
    %c0_i32_1 = arith.constant 0 : i32
    return %arg0, %c0_i32, %c0_i32_0 : i32, i32, i32
  }
  func.func @transform_3(%arg0: i32, %arg1: i32) -> (i32, i32, i32) {
    %c0_i32 = arith.constant 0 : i32
    %c0_i32_0 = arith.constant 0 : i32
    return %arg0, %c0_i32, %arg1 : i32, i32, i32
  }
  func.func @transform_4(%arg0: i32, %arg1: i32) -> (i32, i32, i32) {
    %c0_i32 = arith.constant 0 : i32
    %c0_i32_0 = arith.constant 0 : i32
    return %arg0, %c0_i32, %arg1 : i32, i32, i32
  }
  func.func @transform_5(%arg0: i32, %arg1: i32) -> (i32, i32, i32) {
    %c0_i32 = arith.constant 0 : i32
    %c0_i32_0 = arith.constant 0 : i32
    return %arg0, %arg1, %c0_i32 : i32, i32, i32
  }
  func.func @transform_6(%arg0: i32, %arg1: i32) -> (i32, i32) {
    %c0_i32 = arith.constant 0 : i32
    %c0_i32_0 = arith.constant 0 : i32
    %c0_i32_1 = arith.constant 0 : i32
    return %c0_i32, %c0_i32_0 : i32, i32
  }
  func.func @transform_7(%arg0: i32, %arg1: i32) -> (i32, i32) {
    %c0_i32 = arith.constant 0 : i32
    %c0_i32_0 = arith.constant 0 : i32
    %c0_i32_1 = arith.constant 0 : i32
    return %c0_i32, %c0_i32_0 : i32, i32
  }
  func.func @transform_8(%arg0: i32, %arg1: i32) -> (i32, i32) {
    %c0_i32 = arith.constant 0 : i32
    %c0_i32_0 = arith.constant 0 : i32
    %c0_i32_1 = arith.constant 0 : i32
    return %c0_i32, %c0_i32_0 : i32, i32
  }
}

</mosaic_0001>

<llo_original>
// kernel: _lambda_.3
$region0: #{_lambda_.3}
  #allocation0 [shape = 'u32[]', space=smem, size = 0x4, offset = 0x4, fixed_abs, tag = 'smem constant byte address 0x4 - core index']
  #allocation1 [shape = 'u32[72,128]{1,0:T(1,128)}', space=vmem, size = 0x9000, scoped, tag = 'internal scratch']
  %s0 = inlined_call_operand.vmem [shape: f32[16,32], index: 0, kind: input, shape index: {}]
  %s1 = inlined_call_operand.vmem [shape: bf16[32,128], index: 1, kind: input, shape index: {}]
  %s2 = inlined_call_operand.vmem [shape: f32[16,128], index: 2, kind: output, shape index: {}]
  %s3 = sld [smem:[#allocation0]]
  $region18: #{_lambda_.3} parent=0
    _
  %s5 = ssub.s32 1, %s3
  %s6 = scalar_select 0, %s5, %s3
  // Predicated region
  $region2: #{_lambda_.3} parent=0 // pred_check
    _
  $region3: #{_lambda_.3} parent=0 // pred_check_branch
    %8 = sbr.rel (0) target = $region5
  $region4: #{_lambda_.3} parent=0 // pred_region
    _
  $region5: #{_lambda_.3} parent=0 // pred_fallthru
    _
  // Predicated region
  $region6: #{_lambda_.3} parent=0 // pred_check
    _
  $region7: #{_lambda_.3} parent=0 // pred_check_branch
    %10 = sbr.rel (0) target = $region9
  $region8: #{_lambda_.3} parent=0 // pred_region
    _
  $region9: #{_lambda_.3} parent=0 // pred_fallthru
    _
  %v12 = vld [vmem:[%s0] sm:$0xff]
  %v13 = vld [vmem:[%s0 + $0x8] sm:$0xff]
  %v14 = vpack.c.bf16 %v13, %v12
  %v15 = vld [vmem:[%s1] sm:$0xf]
  %v16 = vld [vmem:[%s1 + $0x4] sm:$0xf]
  %v17 = vld [vmem:[%s1 + $0x8] sm:$0xf]
  %v18 = vld [vmem:[%s1 + $0xc] sm:$0xf]
  %v23 = vunpack.c.l.b16 %v15
  %v24 = vunpack.c.l.b16 %v16
  %v25 = vunpack.c.l.b16 %v17
  %v26 = vunpack.c.l.b16 %v18
  %v27 = vpack.c.b16 %v24, %v23
  %v28 = vpack.c.b16 %v26, %v25
  %vm31 = vcmask 261120
  %v33 = vsel %vm31, %v14, 0
  %35 = vmatpush.bf16.msra.mxu0 0
  %36 = vmatpush.bf16.msra.mxu0 0
  %37 = vmatpush.bf16.msra.mxu0 0
  %38 = vmatpush.bf16.msra.mxu0 0
  %39 = vmatpush.bf16.msra.mxu0 0
  %40 = vmatpush.bf16.msra.mxu0 0
  %41 = vmatpush.bf16.msra.mxu0 %v28
  %42 = vmatpush.bf16.msra.mxu0 %v27
  %43 = vmatmul.bf16.gmra.mxu0 %v33
  %v44 = vpop.f32.mrf.mxu0
  %v45 = vadd.f32 0.0, %v44
  %v46 = vpop.f32.mrf.mxu0
  %v47 = vadd.f32 0.0, %v46
  %48 = vdwg.mxu0
  %49 = vst [vmem:[%s2] sm:$0xff] %v45
  %50 = vst [vmem:[%s2 + $0x8] sm:$0xff] %v47
  // Predicated region
  $region10: #{_lambda_.3} parent=0 // pred_check
    _
  $region11: #{_lambda_.3} parent=0 // pred_check_branch
    %52 = sbr.rel (0) target = $region13
  $region12: #{_lambda_.3} parent=0 // pred_region
    _
  $region13: #{_lambda_.3} parent=0 // pred_fallthru
    _
  // Predicated region
  $region14: #{_lambda_.3} parent=0 // pred_check
    _
  $region15: #{_lambda_.3} parent=0 // pred_check_branch
    %54 = sbr.rel (0) target = $region17
  $region16: #{_lambda_.3} parent=0 // pred_region
    _
  $region17: #{_lambda_.3} parent=0 // pred_fallthru
    _

// kernel: _lambda_.2
$region0: #{_lambda_.2}
  #allocation0 [shape = 'u32[]', space=smem, size = 0x4, offset = 0x4, fixed_abs, tag = 'smem constant byte address 0x4 - core index']
  #allocation1 [shape = 'u32[72,128]{1,0:T(1,128)}', space=vmem, size = 0x9000, scoped, tag = 'internal scratch']
  #allocation2 [shape = 'f32[16,32]{1,0:T(8,128)}', space=vmem, size = 0x2000, scoped, tag = 'scratch operand']
  #allocation3 [shape = 'f32[16,32]{1,0:T(8,128)}', space=vmem, size = 0x2000, scoped, tag = 'scratch operand']
  %s0 = inlined_call_operand.vmem [shape: f32[16,32], index: 0, kind: input, shape index: {}]
  %s1 = inlined_call_operand.vmem [shape: bf16[2,3,32,32], index: 1, kind: input, shape index: {}]
  %s2 = inlined_call_operand.vmem [shape: f32[2,11,32], index: 2, kind: input, shape index: {}]
  %s3 = inlined_call_operand.vmem [shape: bf16[2,32,128], index: 3, kind: input, shape index: {}]
  %s4 = inlined_call_operand.vmem [shape: f32[2,1,128], index: 4, kind: input, shape index: {}]
  %s5 = inlined_call_operand.vmem [shape: bf16[2,128,32], index: 5, kind: input, shape index: {}]
  %s6 = inlined_call_operand.vmem [shape: f32[1,32], index: 6, kind: input, shape index: {}]
  %s7 = inlined_call_operand.vmem [shape: f32[1,32], index: 7, kind: input, shape index: {}]
  %s8 = inlined_call_operand.vmem [shape: f32[16,32], index: 8, kind: output, shape index: {}]
  %s9 = sld [smem:[#allocation0]]
  $region77: #{_lambda_.2} parent=0
    _
  %s11 = ssub.s32 1, %s9
  %s12 = scalar_select 0, %s11, %s9
  loop: start=0, step=1, limit=4
  $region2: #{_lambda_.2} parent=0 // loop_pre_header
    _
  $region3: #{_lambda_.2} parent=0 // loop_header
    %s14 = sphi 0, %s18
    %p15 = scmp.ge.s32.totalorder %s14, 4
    %s21 = sphi 0, %s33
    %s22 = sphi 0, %s29
    %s23 = sphi 0, %s21
    %s24 = sphi 0, %s22
    %s25 = sphi 0, %s23
    %s26 = sphi 0, %s24
    %s34 = sphi 0, %s34
    %s36 = sphi 0, %s34
    %s37 = sphi 0, %s36
    %s51 = sphi 0, %s37
    %s57 = sphi 0, %s59
    %s60 = sphi 0, %s57
    %s61 = sphi 0, %s60
    %s77 = sphi 0, %s61
    %s83 = sphi 0, %s85
    %s86 = sphi 0, %s83
    %s87 = sphi 0, %s86
    %s103 = sphi 0, %s87
    %s111 = sphi 0, %s113
    %s114 = sphi 0, %s111
    %s115 = sphi 0, %s114
    %s131 = sphi 0, %s115
    %s139 = sphi 0, %s141
    %s142 = sphi 0, %s139
    %s143 = sphi 0, %s142
    %s159 = sphi 0, %s143
    %s167 = sphi 0, %s169
    %s170 = sphi 0, %s167
    %s171 = sphi 0, %s170
    %s187 = sphi 0, %s171
    %s191 = sphi 0, %s191
    %s193 = sphi 0, %s191
    %s194 = sphi 0, %s193
    %s208 = sphi 0, %s194
    %s212 = sphi 0, %s212
    %s214 = sphi 0, %s212
    %s215 = sphi 0, %s214
    %s229 = sphi 0, %s215
    %s233 = sphi 0, %s233
    %s235 = sphi 0, %s233
    %s236 = sphi 0, %s235
    %s250 = sphi 0, %s236
  $region4: #{_lambda_.2} parent=0 // loop_header_branch
    %17 = sbr.rel (%p15) target = $region8
  $region5: #{_lambda_.2} parent=0 // loop_body
    %s19 = ssub.s32 %s14, 1
    %s20 = ssub.s32 %s14, 2
    %s27 = sadd.s32 1, %s22
    %p28 = scmp.ge.s32.totalorder %s27, 1
    %s29 = scalar_select %p28, 0, %s27
    %s30 = sadd.s32 1, %s21
    %s31 = scalar_select %p28, %s30, %s21
    %p32 = scmp.ge.s32.totalorder %s31, 2
    %s33 = scalar_select %p32, 0, %s31
    %s35 = sadd.s32 %s34, 1
    %p38 = scmp.eq.s32.totalorder %s14, 1
    %p39 = scmp.ne.s32.totalorder %s34, %s36
    %p40 = scmp.eq.s32.totalorder %s14, 0
    %p41 = por %p39, %p40
    %p42 = scmp.ne.s32.totalorder %s34, %s36
    %p43 = scmp.eq.s32.totalorder %s19, 1
    %p44 = por %p42, %p43
    %p45 = scmp.ne.s32.totalorder %s36, %s37
    %p46 = scmp.eq.s32.totalorder %s19, 0
    %p47 = por %p45, %p46
    %p48 = scmp.ne.s32.totalorder %s36, %s37
    %p49 = scmp.eq.s32.totalorder %s20, 1
    %p50 = por %p48, %p49
    %p52 = scmp.ne.s32.totalorder %s37, %s51
    %p53 = scmp.eq.s32.totalorder %s20, 0
    %p54 = por %p52, %p53
    %s55 = ssub.s32 %s21, %s33
    %p56 = scmp.eq.s32.totalorder %s55, 0
    %s58 = sadd.s32 %s57, 1
    %s59 = scalar_select %p56, %s57, %s58
    %p62 = pneg %p56
    %p63 = scmp.eq.s32.totalorder %s14, 1
    %p64 = por %p62, %p63
    %p65 = scmp.ne.s32.totalorder %s57, %s60
    %p66 = scmp.eq.s32.totalorder %s14, 0
    %p67 = por %p65, %p66
    %p68 = scmp.ne.s32.totalorder %s57, %s60
    %p69 = scmp.eq.s32.totalorder %s19, 1
    %p70 = por %p68, %p69
    %p71 = scmp.ne.s32.totalorder %s60, %s61
    %p72 = scmp.eq.s32.totalorder %s19, 0
    %p73 = por %p71, %p72
    %p74 = scmp.ne.s32.totalorder %s60, %s61
    %p75 = scmp.eq.s32.totalorder %s20, 1
    %p76 = por %p74, %p75
    %p78 = scmp.ne.s32.totalorder %s61, %s77
    %p79 = scmp.eq.s32.totalorder %s20, 0
    %p80 = por %p78, %p79
    %s81 = ssub.s32 %s21, %s33
    %p82 = scmp.eq.s32.totalorder %s81, 0
    %s84 = sadd.s32 %s83, 1
    %s85 = scalar_select %p82, %s83, %s84
    %p88 = pneg %p82
    %p89 = scmp.eq.s32.totalorder %s14, 1
    %p90 = por %p88, %p89
    %p91 = scmp.ne.s32.totalorder %s83, %s86
    %p92 = scmp.eq.s32.totalorder %s14, 0
    %p93 = por %p91, %p92
    %p94 = scmp.ne.s32.totalorder %s83, %s86
    %p95 = scmp.eq.s32.totalorder %s19, 1
    %p96 = por %p94, %p95
    %p97 = scmp.ne.s32.totalorder %s86, %s87
    %p98 = scmp.eq.s32.totalorder %s19, 0
    %p99 = por %p97, %p98
    %p100 = scmp.ne.s32.totalorder %s86, %s87
    %p101 = scmp.eq.s32.totalorder %s20, 1
    %p102 = por %p100, %p101
    %p104 = scmp.ne.s32.totalorder %s87, %s103
    %p105 = scmp.eq.s32.totalorder %s20, 0
    %p106 = por %p104, %p105
    %s107 = ssub.s32 %s21, %s33
    %s108 = ssub.s32 %s22, %s29
    %s109 = sor.u32 %s107, %s108
    %p110 = scmp.eq.s32.totalorder %s109, 0
    %s112 = sadd.s32 %s111, 1
    %s113 = scalar_select %p110, %s111, %s112
    %p116 = pneg %p110
    %p117 = scmp.eq.s32.totalorder %s14, 1
    %p118 = por %p116, %p117
    %p119 = scmp.ne.s32.totalorder %s111, %s114
    %p120 = scmp.eq.s32.totalorder %s14, 0
    %p121 = por %p119, %p120
    %p122 = scmp.ne.s32.totalorder %s111, %s114
    %p123 = scmp.eq.s32.totalorder %s19, 1
    %p124 = por %p122, %p123
    %p125 = scmp.ne.s32.totalorder %s114, %s115
    %p126 = scmp.eq.s32.totalorder %s19, 0
    %p127 = por %p125, %p126
    %p128 = scmp.ne.s32.totalorder %s114, %s115
    %p129 = scmp.eq.s32.totalorder %s20, 1
    %p130 = por %p128, %p129
    %p132 = scmp.ne.s32.totalorder %s115, %s131
    %p133 = scmp.eq.s32.totalorder %s20, 0
    %p134 = por %p132, %p133
    %s135 = ssub.s32 %s21, %s33
    %s136 = ssub.s32 %s22, %s29
    %s137 = sor.u32 %s135, %s136
    %p138 = scmp.eq.s32.totalorder %s137, 0
    %s140 = sadd.s32 %s139, 1
    %s141 = scalar_select %p138, %s139, %s140
    %p144 = pneg %p138
    %p145 = scmp.eq.s32.totalorder %s14, 1
    %p146 = por %p144, %p145
    %p147 = scmp.ne.s32.totalorder %s139, %s142
    %p148 = scmp.eq.s32.totalorder %s14, 0
    %p149 = por %p147, %p148
    %p150 = scmp.ne.s32.totalorder %s139, %s142
    %p151 = scmp.eq.s32.totalorder %s19, 1
    %p152 = por %p150, %p151
    %p153 = scmp.ne.s32.totalorder %s142, %s143
    %p154 = scmp.eq.s32.totalorder %s19, 0
    %p155 = por %p153, %p154
    %p156 = scmp.ne.s32.totalorder %s142, %s143
    %p157 = scmp.eq.s32.totalorder %s20, 1
    %p158 = por %p156, %p157
    %p160 = scmp.ne.s32.totalorder %s143, %s159
    %p161 = scmp.eq.s32.totalorder %s20, 0
    %p162 = por %p160, %p161
    %s163 = ssub.s32 %s21, %s33
    %s164 = ssub.s32 %s22, %s29
    %s165 = sor.u32 %s163, %s164
    %p166 = scmp.eq.s32.totalorder %s165, 0
    %s168 = sadd.s32 %s167, 1
    %s169 = scalar_select %p166, %s167, %s168
    %p172 = pneg %p166
    %p173 = scmp.eq.s32.totalorder %s14, 1
    %p174 = por %p172, %p173
    %p175 = scmp.ne.s32.totalorder %s167, %s170
    %p176 = scmp.eq.s32.totalorder %s14, 0
    %p177 = por %p175, %p176
    %p178 = scmp.ne.s32.totalorder %s167, %s170
    %p179 = scmp.eq.s32.totalorder %s19, 1
    %p180 = por %p178, %p179
    %p181 = scmp.ne.s32.totalorder %s170, %s171
    %p182 = scmp.eq.s32.totalorder %s19, 0
    %p183 = por %p181, %p182
    %p184 = scmp.ne.s32.totalorder %s170, %s171
    %p185 = scmp.eq.s32.totalorder %s20, 1
    %p186 = por %p184, %p185
    %p188 = scmp.ne.s32.totalorder %s171, %s187
    %p189 = scmp.eq.s32.totalorder %s20, 0
    %p190 = por %p188, %p189
    %s192 = sadd.s32 %s191, 1
    %p195 = scmp.eq.s32.totalorder %s14, 1
    %p196 = scmp.ne.s32.totalorder %s191, %s193
    %p197 = scmp.eq.s32.totalorder %s14, 0
    %p198 = por %p196, %p197
    %p199 = scmp.ne.s32.totalorder %s191, %s193
    %p200 = scmp.eq.s32.totalorder %s19, 1
    %p201 = por %p199, %p200
    %p202 = scmp.ne.s32.totalorder %s193, %s194
    %p203 = scmp.eq.s32.totalorder %s19, 0
    %p204 = por %p202, %p203
    %p205 = scmp.ne.s32.totalorder %s193, %s194
    %p206 = scmp.eq.s32.totalorder %s20, 1
    %p207 = por %p205, %p206
    %p209 = scmp.ne.s32.totalorder %s194, %s208
    %p210 = scmp.eq.s32.totalorder %s20, 0
    %p211 = por %p209, %p210
    %s213 = sadd.s32 %s212, 1
    %p216 = scmp.eq.s32.totalorder %s14, 1
    %p217 = scmp.ne.s32.totalorder %s212, %s214
    %p218 = scmp.eq.s32.totalorder %s14, 0
    %p219 = por %p217, %p218
    %p220 = scmp.ne.s32.totalorder %s212, %s214
    %p221 = scmp.eq.s32.totalorder %s19, 1
    %p222 = por %p220, %p221
    %p223 = scmp.ne.s32.totalorder %s214, %s215
    %p224 = scmp.eq.s32.totalorder %s19, 0
    %p225 = por %p223, %p224
    %p226 = scmp.ne.s32.totalorder %s214, %s215
    %p227 = scmp.eq.s32.totalorder %s20, 1
    %p228 = por %p226, %p227
    %p230 = scmp.ne.s32.totalorder %s215, %s229
    %p231 = scmp.eq.s32.totalorder %s20, 0
    %p232 = por %p230, %p231
    %s234 = sadd.s32 %s233, 1
    %p237 = scmp.eq.s32.totalorder %s14, 1
    %p238 = scmp.ne.s32.totalorder %s233, %s235
    %p239 = scmp.eq.s32.totalorder %s14, 0
    %p240 = por %p238, %p239
    %p241 = scmp.ne.s32.totalorder %s233, %s235
    %p242 = scmp.eq.s32.totalorder %s19, 1
    %p243 = por %p241, %p242
    %p244 = scmp.ne.s32.totalorder %s235, %s236
    %p245 = scmp.eq.s32.totalorder %s19, 0
    %p246 = por %p244, %p245
    %p247 = scmp.ne.s32.totalorder %s235, %s236
    %p248 = scmp.eq.s32.totalorder %s20, 1
    %p249 = por %p247, %p248
    %p251 = scmp.ne.s32.totalorder %s236, %s250
    %p252 = scmp.eq.s32.totalorder %s20, 0
    %p253 = por %p251, %p252
    %p254 = scmp.le.s32.totalorder 1, %s14
    %p255 = scmp.lt.s32.totalorder %s14, 3
    %p256 = pnand %p254, %p255
    %p257 = pneg %p256
    // Predicated region
    $region9: #{_lambda_.2} parent=5 // pred_check
      _
    $region10: #{_lambda_.2} parent=5 // pred_check_branch
      %259 = sbr.rel (%p256) target = $region12
    $region11: #{_lambda_.2} parent=5 // pred_region
      %s260 = ssub.s32 %s14, 1
      // Predicated region
      $region13: #{_lambda_.2} parent=11 // pred_check
        %p261 = pneg %p47
      $region14: #{_lambda_.2} parent=11 // pred_check_branch
        %263 = sbr.rel (%p261) target = $region16
      $region15: #{_lambda_.2} parent=11 // pred_region
        _
      $region16: #{_lambda_.2} parent=11 // pred_fallthru
        _
      // Predicated region
      $region17: #{_lambda_.2} parent=11 // pred_check
        %p264 = pneg %p204
      $region18: #{_lambda_.2} parent=11 // pred_check_branch
        %266 = sbr.rel (%p264) target = $region20
      $region19: #{_lambda_.2} parent=11 // pred_region
        _
      $region20: #{_lambda_.2} parent=11 // pred_fallthru
        _
      // Predicated region
      $region21: #{_lambda_.2} parent=11 // pred_check
        %p267 = pneg %p225
      $region22: #{_lambda_.2} parent=11 // pred_check_branch
        %269 = sbr.rel (%p267) target = $region24
      $region23: #{_lambda_.2} parent=11 // pred_region
        _
      $region24: #{_lambda_.2} parent=11 // pred_fallthru
        _
    $region12: #{_lambda_.2} parent=5 // pred_fallthru
      _
    %p270 = scmp.lt.s32.totalorder %s14, 2
    // Predicated region
    $region25: #{_lambda_.2} parent=5 // pred_check
      %p271 = pneg %p270
    $region26: #{_lambda_.2} parent=5 // pred_check_branch
      %273 = sbr.rel (%p271) target = $region28
    $region27: #{_lambda_.2} parent=5 // pred_region
      // Predicated region
      $region29: #{_lambda_.2} parent=27 // pred_check
        %p274 = pneg %p67
      $region30: #{_lambda_.2} parent=27 // pred_check_branch
        %276 = sbr.rel (%p274) target = $region32
      $region31: #{_lambda_.2} parent=27 // pred_region
        %p277 = scmp.lt.s32.totalorder %s21, 1
        %s278 = scalar_select %p277, %s21, 1
        %s279 = smul.addr %s278, 12
        %s280 = smul.addr %s279, 4
        %s281 = scalar_lea.vmem %s1, %s280
      $region32: #{_lambda_.2} parent=27 // pred_fallthru
        _
      // Predicated region
      $region33: #{_lambda_.2} parent=27 // pred_check
        %p282 = pneg %p93
      $region34: #{_lambda_.2} parent=27 // pred_check_branch
        %284 = sbr.rel (%p282) target = $region36
      $region35: #{_lambda_.2} parent=27 // pred_region
        %p285 = scmp.lt.s32.totalorder %s21, 1
        %s286 = scalar_select %p285, %s21, 1
        %s287 = smul.addr %s286, 2
        %s288 = smul.addr %s287, 8
        %s289 = scalar_lea.vmem %s2, %s288
      $region36: #{_lambda_.2} parent=27 // pred_fallthru
        _
      // Predicated region
      $region37: #{_lambda_.2} parent=27 // pred_check
        %p290 = pneg %p121
      $region38: #{_lambda_.2} parent=27 // pred_check_branch
        %292 = sbr.rel (%p290) target = $region40
      $region39: #{_lambda_.2} parent=27 // pred_region
        %p293 = scmp.lt.s32.totalorder %s21, 1
        %s294 = scalar_select %p293, %s21, 1
        %p295 = scmp.lt.s32.totalorder %s22, 0
        %s296 = scalar_select %p295, %s22, 0
        %s297 = smul.addr %s294, 4
        %s298 = sadd.s32 %s296, %s297
        %s299 = smul.addr %s298, 4
        %s300 = scalar_lea.vmem %s3, %s299
      $region40: #{_lambda_.2} parent=27 // pred_fallthru
        _
      // Predicated region
      $region41: #{_lambda_.2} parent=27 // pred_check
        %p301 = pneg %p149
      $region42: #{_lambda_.2} parent=27 // pred_check_branch
        %303 = sbr.rel (%p301) target = $region44
      $region43: #{_lambda_.2} parent=27 // pred_region
        %p304 = scmp.lt.s32.totalorder %s21, 1
        %s305 = scalar_select %p304, %s21, 1
        %p306 = scmp.lt.s32.totalorder %s22, 0
        %s307 = scalar_select %p306, %s22, 0
        %s308 = sadd.s32 %s307, %s305
        %s309 = scalar_lea.vmem %s4, %s308
      $region44: #{_lambda_.2} parent=27 // pred_fallthru
        _
      // Predicated region
      $region45: #{_lambda_.2} parent=27 // pred_check
        %p310 = pneg %p177
      $region46: #{_lambda_.2} parent=27 // pred_check_branch
        %312 = sbr.rel (%p310) target = $region48
      $region47: #{_lambda_.2} parent=27 // pred_region
        %s313 = smul.u32 16, %s22
        %p314 = scmp.lt.s32.totalorder %s21, 1
        %s315 = scalar_select %p314, %s21, 1
        %p316 = scmp.lt.s32.totalorder %s313, 15
        %s317 = scalar_select %p316, %s313, 15
        %s318 = smul.addr %s315, 16
        %s319 = sadd.s32 %s317, %s318
        %s320 = smul.addr %s319, 4
        %s321 = scalar_lea.vmem %s5, %s320
        %s322 = smul.u32 16, %s22
      $region48: #{_lambda_.2} parent=27 // pred_fallthru
        _
    $region28: #{_lambda_.2} parent=5 // pred_fallthru
      _
    %p323 = scmp.le.s32.totalorder 1, %s14
    %p324 = scmp.lt.s32.totalorder %s14, 3
    %p325 = pnand %p323, %p324
    %p326 = pneg %p325
    // Predicated region
    $region49: #{_lambda_.2} parent=5 // pred_check
      _
    $region50: #{_lambda_.2} parent=5 // pred_check_branch
      %328 = sbr.rel (%p325) target = $region52
    $region51: #{_lambda_.2} parent=5 // pred_region
      %s329 = ssub.s32 %s14, 1
      %p330 = pneg %p47
      %p331 = pneg %p44
      %p332 = scmp.lt.s32.totalorder %s23, 1
      %s333 = scalar_select %p332, %s23, 1
      %s334 = smul.addr %s333, 12
      %s335 = smul.addr %s334, 4
      %s336 = scalar_lea.vmem %s1, %s335
      %p337 = pneg %p73
      %p338 = pneg %p70
      %p339 = scmp.lt.s32.totalorder %s23, 1
      %s340 = scalar_select %p339, %s23, 1
      %s341 = smul.addr %s340, 2
      %s342 = smul.addr %s341, 8
      %s343 = scalar_lea.vmem %s2, %s342
      %p344 = pneg %p99
      %p345 = pneg %p96
      %p346 = scmp.lt.s32.totalorder %s23, 1
      %s347 = scalar_select %p346, %s23, 1
      %p348 = scmp.lt.s32.totalorder %s24, 0
      %s349 = scalar_select %p348, %s24, 0
      %s350 = smul.addr %s347, 4
      %s351 = sadd.s32 %s349, %s350
      %s352 = smul.addr %s351, 4
      %s353 = scalar_lea.vmem %s3, %s352
      %p354 = pneg %p127
      %p355 = pneg %p124
      %p356 = scmp.lt.s32.totalorder %s23, 1
      %s357 = scalar_select %p356, %s23, 1
      %p358 = scmp.lt.s32.totalorder %s24, 0
      %s359 = scalar_select %p358, %s24, 0
      %s360 = sadd.s32 %s359, %s357
      %s361 = scalar_lea.vmem %s4, %s360
      %p362 = pneg %p155
      %p363 = pneg %p152
      %s364 = smul.u32 16, %s24
      %p365 = scmp.lt.s32.totalorder %s23, 1
      %s366 = scalar_select %p365, %s23, 1
      %p367 = scmp.lt.s32.totalorder %s364, 15
      %s368 = scalar_select %p367, %s364, 15
      %s369 = smul.addr %s366, 16
      %s370 = sadd.s32 %s368, %s369
      %s371 = smul.addr %s370, 4
      %s372 = scalar_lea.vmem %s5, %s371
      %p373 = pneg %p183
      %p374 = pneg %p180
      %p375 = pneg %p204
      %p376 = pneg %p201
      %p377 = pneg %p225
      %p378 = pneg %p222
      %p379 = pneg %p246
      %p380 = pneg %p243
      %p381 = scmp.lt.s32.totalorder %s23, 1
      %s382 = scalar_select %p381, %s23, 1
      %s383 = smul.addr %s382, 12
      %s384 = smul.addr %s383, 4
      %s385 = scalar_lea.vmem %s1, %s384
      %p386 = scmp.lt.s32.totalorder %s23, 1
      %s387 = scalar_select %p386, %s23, 1
      %s388 = smul.addr %s387, 2
      %s389 = smul.addr %s388, 8
      %s390 = scalar_lea.vmem %s2, %s389
      %p391 = scmp.lt.s32.totalorder %s23, 1
      %s392 = scalar_select %p391, %s23, 1
      %p393 = scmp.lt.s32.totalorder %s24, 0
      %s394 = scalar_select %p393, %s24, 0
      %s395 = smul.addr %s392, 4
      %s396 = sadd.s32 %s394, %s395
      %s397 = smul.addr %s396, 4
      %s398 = scalar_lea.vmem %s3, %s397
      %p399 = scmp.lt.s32.totalorder %s23, 1
      %s400 = scalar_select %p399, %s23, 1
      %p401 = scmp.lt.s32.totalorder %s24, 0
      %s402 = scalar_select %p401, %s24, 0
      %s403 = sadd.s32 %s402, %s400
      %s404 = scalar_lea.vmem %s4, %s403
      %s405 = smul.u32 16, %s24
      %p406 = scmp.lt.s32.totalorder %s23, 1
      %s407 = scalar_select %p406, %s23, 1
      %p408 = scmp.lt.s32.totalorder %s405, 15
      %s409 = scalar_select %p408, %s405, 15
      %s410 = smul.addr %s407, 16
      %s411 = sadd.s32 %s409, %s410
      %s412 = smul.addr %s411, 4
      %s413 = scalar_lea.vmem %s5, %s412
      %s414 = smul.u32 16, %s24
      %v416 = vld [vmem:[%s390] sm:$0xff]
      %v417 = vld [vmem:[%s390 + $0x8] sm:$0x7]
      %v418 = vld [vmem:[%s385] sm:$0xf]
      %v419 = vld [vmem:[%s385 + $0x4] sm:$0xf]
      %v420 = vld [vmem:[%s385 + $0x8] sm:$0xf]
      %v421 = vld [vmem:[%s385 + $0xc] sm:$0xf]
      %v422 = vld [vmem:[%s385 + $0x10] sm:$0xf]
      %v423 = vld [vmem:[%s385 + $0x14] sm:$0xf]
      %v424 = vld [vmem:[%s385 + $0x18] sm:$0xf]
      %v425 = vld [vmem:[%s385 + $0x1c] sm:$0xf]
      %v426 = vld [vmem:[%s385 + $0x20] sm:$0xf]
      %v427 = vld [vmem:[%s385 + $0x24] sm:$0xf]
      %v428 = vld [vmem:[%s385 + $0x28] sm:$0xf]
      %v429 = vld [vmem:[%s385 + $0x2c] sm:$0xf]
      %p430 = scmp.eq.s32.totalorder %s23, 0
      %p431 = scmp.eq.s32.totalorder %s24, 0
      %p432 = pnand %p430, %p431
      %p433 = pneg %p432
      // Predicated region
      $region53: #{_lambda_.2} parent=51 // pred_check
        _
      $region54: #{_lambda_.2} parent=51 // pred_check_branch
        %435 = sbr.rel (%p432) target = $region56
      $region55: #{_lambda_.2} parent=51 // pred_region
        %v436 = vld [vmem:[%s0] sm:$0xff]
        %v437 = vld [vmem:[%s0 + $0x8] sm:$0xff]
        %vm438 = vcmask 261120
        %439 = vst.msk [vmem:[#allocation2] sm:$0xff] %vm438, %v436
        %440 = vst.msk [vmem:[#allocation2 + $0x8] sm:$0xff] %vm438, %v437
        %441 = vst.msk [vmem:[%s8] sm:$0xff] %vm438, 0.0
        %442 = vst.msk [vmem:[%s8 + $0x8] sm:$0xff] %vm438, 0.0
      $region56: #{_lambda_.2} parent=51 // pred_fallthru
        _
      // Predicated region
      $region57: #{_lambda_.2} parent=51 // pred_check
        %p443 = pneg %p431
      $region58: #{_lambda_.2} parent=51 // pred_check_branch
        %445 = sbr.rel (%p443) target = $region60
      $region59: #{_lambda_.2} parent=51 // pred_region
        %v446 = vld [vmem:[#allocation2] sm:$0xff]
        %v447 = vld [vmem:[#allocation2 + $0x8] sm:$0xff]
        %vm448 = vcmask 261120
        %v449 = vsel %vm448, %v446, 0.0
        %450 = vadd.xlane.f32.xlu0 %v449
        %v451 = vpop.xlane.xlu0 %450
        %v452 = vrcp.pop 32.0
        %v453 = vmul.f32 32.0, %v452
        %v454 = vsub.f32 1.0, %v453
        %v455 = vmul.f32 %v452, %v454
        %v456 = vadd.f32 %v452, %v455
        %vm457 = vweird.f32 %v452
        %v458 = vsel %vm457, %v452, %v456
        %v459 = vmul.f32 %v451, %v458
        %v460 = vsub.f32 %v446, %v459
        %v461 = vmul.f32 %v460, %v460
        %v462 = vsel %vm448, %v461, 0.0
        %463 = vadd.xlane.f32.xlu0 %v462
        %v464 = vpop.xlane.xlu0 %463
        %v465 = vmul.f32 %v464, %v458
        %v466 = vadd.f32 %v465, 1e-05
        %v467 = vrsqrt.pop %v466
        %v468 = vmul.f32 %v467, %v466
        %v469 = vmul.f32 %v468, %v467
        %v470 = vmul.f32 0.5, %v469
        %v471 = vsub.f32 1.5, %v470
        %v472 = vmul.f32 %v467, %v471
        %vm473 = vweird.f32 %v466
        %vm474 = vweird.f32 %v467
        %vm475 = vmor %vm473, %vm474
        %v476 = vsel %vm475, %v467, %v472
        %v477 = vmul.f32 %v460, %v476
        %v478 = vperm.slane %v416, 0
        %v479 = vmul.f32 %v477, %v478
        %v480 = vperm.slane %v416, 1
        %v481 = vadd.f32 %v479, %v480
        %v482 = vsel %vm448, %v481, 0.0
        %483 = vadd.xlane.f32.xlu0 %v482
        %v484 = vpop.xlane.xlu0 %483
        %v485 = vmul.f32 %v484, %v458
        %v486 = vsub.f32 %v481, %v485
        %v487 = vmul.f32 %v486, %v486
        %v488 = vsel %vm448, %v487, 0.0
        %489 = vadd.xlane.f32.xlu0 %v488
        %v490 = vpop.xlane.xlu0 %489
        %v491 = vmul.f32 %v490, %v458
        %v492 = vadd.f32 %v491, 1e-05
        %v493 = vrsqrt.pop %v492
        %v494 = vmul.f32 %v493, %v492
        %v495 = vmul.f32 %v494, %v493
        %v496 = vmul.f32 0.5, %v495
        %v497 = vsub.f32 1.5, %v496
        %v498 = vmul.f32 %v493, %v497
        %vm499 = vweird.f32 %v492
        %vm500 = vweird.f32 %v493
        %vm501 = vmor %vm499, %vm500
        %v502 = vsel %vm501, %v493, %v498
        %v503 = vmul.f32 %v486, %v502
        %v504 = vperm.slane %v416, 2
        %v505 = vmul.f32 %v503, %v504
        %v506 = vperm.slane %v416, 3
        %v507 = vadd.f32 %v505, %v506
        %v508 = vpack.c.bf16 %v507, %v507
        %v509 = vperm.slane %v416, 4
        %v510 = vmul.f32 %v503, %v509
        %v511 = vperm.slane %v416, 5
        %v512 = vadd.f32 %v510, %v511
        %v513 = vpack.c.bf16 %v512, %v512
        %v514 = vperm.slane %v416, 6
        %v519 = vunpack.c.l.b16 %v418
        %v520 = vunpack.c.l.b16 %v419
        %v521 = vunpack.c.l.b16 %v420
        %v522 = vunpack.c.l.b16 %v421
        %v523 = vpack.c.b16 %v520, %v519
        %v524 = vpack.c.b16 %v522, %v521
        %v528 = vsel %vm448, %v508, 0
        %530 = vmatpush.bf16.msra.mxu0 0
        %531 = vmatpush.bf16.msra.mxu0 0
        %532 = vmatpush.bf16.msra.mxu0 0
        %533 = vmatpush.bf16.msra.mxu0 0
        %534 = vmatpush.bf16.msra.mxu0 0
        %535 = vmatpush.bf16.msra.mxu0 0
        %536 = vmatpush.bf16.msra.mxu0 %v524
        %537 = vmatpush.bf16.msra.mxu0 %v523
        %538 = vmatmul.bf16.gmra.mxu0 %v528
        %v539 = vpop.f32.mrf.mxu0
        %v540 = vadd.f32 %v514, %v539
        %v541 = vpop.f32.mrf.mxu0
        %542 = vdwg.mxu0
        %v543 = vlaneseq
        %v544 = vshrl.u32 %v543, 7
        %vm545 = vcmp.lt.s32.totalorder %v544, 2
        %v546 = vsel %vm545, 1, 0
        %vm547 = vcmp.eq.s32.totalorder %v546, 1
        %v548 = vsel %vm547, %v540, 0.0
        %v549 = vpack.c.bf16 %v548, %v548
        %v554 = vunpack.c.l.b16 %v426
        %v555 = vunpack.c.l.b16 %v427
        %v556 = vunpack.c.l.b16 %v428
        %v557 = vunpack.c.l.b16 %v429
        %v558 = vpack.c.b16 %v555, %v554
        %v559 = vpack.c.b16 %v557, %v556
        %v563 = vsel %vm448, %v513, 0
        %565 = vmatpush.bf16.msra.mxu0 0
        %566 = vmatpush.bf16.msra.mxu0 0
        %567 = vmatpush.bf16.msra.mxu0 0
        %568 = vmatpush.bf16.msra.mxu0 0
        %569 = vmatpush.bf16.msra.mxu0 0
        %570 = vmatpush.bf16.msra.mxu0 0
        %571 = vmatpush.bf16.msra.mxu0 %v559
        %572 = vmatpush.bf16.msra.mxu0 %v558
        %573 = vmatmul.bf16.gmra.mxu0 %v563
        %v574 = vpop.f32.mrf.mxu0
        %v575 = vadd.f32 0.0, %v574
        %v576 = vpop.f32.mrf.mxu0
        %577 = vdwg.mxu0
        %v582 = vunpack.c.l.b16 %v422
        %v583 = vunpack.c.l.b16 %v423
        %v584 = vunpack.c.l.b16 %v424
        %v585 = vunpack.c.l.b16 %v425
        %v586 = vpack.c.b16 %v583, %v582
        %v587 = vpack.c.b16 %v585, %v584
        %v591 = vsel %vm448, %v549, 0
        %593 = vmatpush.bf16.msra.mxu0 0
        %594 = vmatpush.bf16.msra.mxu0 0
        %595 = vmatpush.bf16.msra.mxu0 0
        %596 = vmatpush.bf16.msra.mxu0 0
        %597 = vmatpush.bf16.msra.mxu0 0
        %598 = vmatpush.bf16.msra.mxu0 0
        %599 = vmatpush.bf16.msra.mxu0 %v587
        %600 = vmatpush.bf16.msra.mxu0 %v586
        %601 = vmatmul.bf16.gmra.mxu0 %v591
        %v602 = vpop.f32.mrf.mxu0
        %v603 = vadd.f32 %v575, %v602
        %v604 = vpop.f32.mrf.mxu0
        %605 = vdwg.mxu0
        %v606 = vperm.slane %v416, 7
        %v607 = vadd.f32 %v603, %v606
        %v608 = vadd.f32 %v446, %v607
        %v609 = vadd.f32 %v447, %v607
        %v610 = vsel %vm448, %v608, 0.0
        %611 = vadd.xlane.f32.xlu0 %v610
        %v612 = vpop.xlane.xlu0 %611
        %v613 = vsel %vm448, %v609, 0.0
        %614 = vadd.xlane.f32.xlu0 %v613
        %v615 = vpop.xlane.xlu0 %614
        %v616 = vmul.f32 %v612, %v458
        %v617 = vmul.f32 %v615, %v458
        %v618 = vsub.f32 %v608, %v616
        %v619 = vsub.f32 %v609, %v617
        %v620 = vmul.f32 %v618, %v618
        %v621 = vmul.f32 %v619, %v619
        %v622 = vsel %vm448, %v620, 0.0
        %623 = vadd.xlane.f32.xlu0 %v622
        %v624 = vpop.xlane.xlu0 %623
        %v625 = vsel %vm448, %v621, 0.0
        %626 = vadd.xlane.f32.xlu0 %v625
        %v627 = vpop.xlane.xlu0 %626
        %v628 = vmul.f32 %v624, %v458
        %v629 = vmul.f32 %v627, %v458
        %v630 = vadd.f32 %v628, 1e-05
        %v631 = vadd.f32 %v629, 1e-05
        %v632 = vrsqrt.pop %v630
        %v633 = vmul.f32 %v632, %v630
        %v634 = vmul.f32 %v633, %v632
        %v635 = vmul.f32 0.5, %v634
        %v636 = vsub.f32 1.5, %v635
        %v637 = vmul.f32 %v632, %v636
        %vm638 = vweird.f32 %v630
        %vm639 = vweird.f32 %v632
        %vm640 = vmor %vm638, %vm639
        %v641 = vsel %vm640, %v632, %v637
        %v642 = vrsqrt.pop %v631
        %v643 = vmul.f32 %v642, %v631
        %v644 = vmul.f32 %v643, %v642
        %v645 = vmul.f32 0.5, %v644
        %v646 = vsub.f32 1.5, %v645
        %v647 = vmul.f32 %v642, %v646
        %vm648 = vweird.f32 %v631
        %vm649 = vweird.f32 %v642
        %vm650 = vmor %vm648, %vm649
        %v651 = vsel %vm650, %v642, %v647
        %v652 = vmul.f32 %v618, %v641
        %v653 = vmul.f32 %v619, %v651
        %v654 = vperm.slane %v417, 0
        %v655 = vmul.f32 %v652, %v654
        %v656 = vmul.f32 %v653, %v654
        %v657 = vperm.slane %v417, 1
        %v658 = vadd.f32 %v655, %v657
        %v659 = vadd.f32 %v656, %v657
        %660 = vst.msk [vmem:[#allocation3] sm:$0xff] %vm448, %v658
        %661 = vst.msk [vmem:[#allocation3 + $0x8] sm:$0xff] %vm448, %v659
        %v662 = vperm.slane %v417, 2
        %v663 = vadd.f32 %v608, %v662
        %v664 = vadd.f32 %v609, %v662
        %665 = vst.msk [vmem:[#allocation2] sm:$0xff] %vm448, %v663
        %666 = vst.msk [vmem:[#allocation2 + $0x8] sm:$0xff] %vm448, %v664
      $region60: #{_lambda_.2} parent=51 // pred_fallthru
        _
      %v667 = vld [vmem:[#allocation3] sm:$0xff]
      %v668 = vld [vmem:[#allocation3 + $0x8] sm:$0xff]
      %v669 = vpack.c.bf16 %v668, %v667
      %v670 = vld [vmem:[%s398] sm:$0xf]
      %v671 = vld [vmem:[%s398 + $0x4] sm:$0xf]
      %v672 = vld [vmem:[%s398 + $0x8] sm:$0xf]
      %v673 = vld [vmem:[%s398 + $0xc] sm:$0xf]
      %v674 = vld [vmem:[%s404] sm:$0x1]
      %v676 = vperm.slane %v674, 0
      %v682 = vunpack.c.l.b16 %v670
      %v683 = vunpack.c.l.b16 %v671
      %v684 = vunpack.c.l.b16 %v672
      %v685 = vunpack.c.l.b16 %v673
      %v686 = vpack.c.b16 %v683, %v682
      %v687 = vpack.c.b16 %v685, %v684
      %vm690 = vcmask 261120
      %v692 = vsel %vm690, %v669, 0
      %694 = vmatpush.bf16.msra.mxu0 0
      %695 = vmatpush.bf16.msra.mxu0 0
      %696 = vmatpush.bf16.msra.mxu0 0
      %697 = vmatpush.bf16.msra.mxu0 0
      %698 = vmatpush.bf16.msra.mxu0 0
      %699 = vmatpush.bf16.msra.mxu0 0
      %700 = vmatpush.bf16.msra.mxu0 %v687
      %701 = vmatpush.bf16.msra.mxu0 %v686
      %702 = vmatmul.bf16.gmra.mxu0 %v692
      %v703 = vpop.f32.mrf.mxu0
      %v704 = vadd.f32 %v676, %v703
      %v705 = vpop.f32.mrf.mxu0
      %v706 = vadd.f32 %v676, %v705
      %707 = vdwg.mxu0
      %v708 = vmul.f32 %v704, 0.5
      %v709 = vmul.f32 %v706, 0.5
      %v710 = vmul.f32 %v704, 0.70710677
      %v711 = vmul.f32 %v706, 0.70710677
      %v712 = vand.u32 2147483647, %v710
      %v713 = vand.u32 2147483647, %v711
      %v714 = vmul.f32 %v712, 0.3275911
      %v715 = vmul.f32 %v713, 0.3275911
      %v716 = vadd.f32 %v714, 1.0
      %v717 = vadd.f32 %v715, 1.0
      %v718 = vrcp.pop %v716
      %v719 = vmul.f32 %v716, %v718
      %v720 = vsub.f32 1.0, %v719
      %v721 = vmul.f32 %v718, %v720
      %v722 = vadd.f32 %v718, %v721
      %vm723 = vweird.f32 %v716
      %vm724 = vweird.f32 %v718
      %vm725 = vmor %vm723, %vm724
      %v726 = vsel %vm725, %v718, %v722
      %v727 = vand.u32 2147483647, %v716
      %vm728 = vcmp.eq.f32.partialorder %v727, 8.507059e+37
      %v729 = vand.u32 %v716, 2147483648
      %v730 = vor.u32 1.1754944e-38, %v729
      %v731 = vsel %vm728, %v730, %v726
      %v732 = vmul.f32 1.0, %v731
      %v733 = vrcp.pop %v717
      %v734 = vmul.f32 %v717, %v733
      %v735 = vsub.f32 1.0, %v734
      %v736 = vmul.f32 %v733, %v735
      %v737 = vadd.f32 %v733, %v736
      %vm738 = vweird.f32 %v717
      %vm739 = vweird.f32 %v733
      %vm740 = vmor %vm738, %vm739
      %v741 = vsel %vm740, %v733, %v737
      %v742 = vand.u32 2147483647, %v717
      %vm743 = vcmp.eq.f32.partialorder %v742, 8.507059e+37
      %v744 = vand.u32 %v717, 2147483648
      %v745 = vor.u32 1.1754944e-38, %v744
      %v746 = vsel %vm743, %v745, %v741
      %v747 = vmul.f32 1.0, %v746
      %v748 = vmul.f32 %v732, 1.0614054
      %v749 = vmul.f32 %v747, 1.0614054
      %v750 = vadd.f32 %v748, -1.4531521
      %v751 = vadd.f32 %v749, -1.4531521
      %v752 = vmul.f32 %v750, %v732
      %v753 = vmul.f32 %v751, %v747
      %v754 = vadd.f32 %v752, 1.4214138
      %v755 = vadd.f32 %v753, 1.4214138
      %v756 = vmul.f32 %v754, %v732
      %v757 = vmul.f32 %v755, %v747
      %v758 = vadd.f32 %v756, -0.28449672
      %v759 = vadd.f32 %v757, -0.28449672
      %v760 = vmul.f32 %v758, %v732
      %v761 = vmul.f32 %v759, %v747
      %v762 = vadd.f32 %v760, 0.2548296
      %v763 = vadd.f32 %v761, 0.2548296
      %v764 = vmul.f32 %v762, %v732
      %v765 = vmul.f32 %v763, %v747
      %v766 = vsub.f32 0.0, %v712
      %v767 = vsub.f32 0.0, %v713
      %v768 = vmul.f32 %v766, %v712
      %v769 = vmul.f32 %v767, %v713
      %v770 = vmul.f32 %v768, 1.442695
      %v771 = vpow.pop %v770
      %v772 = vmul.f32 %v769, 1.442695
      %v773 = vpow.pop %v772
      %v774 = vmul.f32 %v764, %v771
      %v775 = vmul.f32 %v765, %v773
      %v776 = vsub.f32 1.0, %v774
      %v777 = vsub.f32 1.0, %v775
      %vm778 = vcmp.ge.f32.partialorder %v710, 0.0
      %vm779 = vcmp.ge.f32.partialorder %v711, 0.0
      %v780 = vsub.f32 0.0, %v776
      %v781 = vsub.f32 0.0, %v777
      %v782 = vsel %vm778, %v776, %v780
      %v783 = vsel %vm779, %v777, %v781
      %v784 = vadd.f32 %v782, 1.0
      %v785 = vadd.f32 %v783, 1.0
      %v786 = vmul.f32 %v708, %v784
      %v787 = vmul.f32 %v709, %v785
      %v788 = vld [vmem:[#allocation2] sm:$0xff]
      %v789 = vld [vmem:[#allocation2 + $0x8] sm:$0xff]
      %v790 = vpack.c.bf16 %v787, %v786
      %v791 = vld [vmem:[%s413] sm:$0xf]
      %v792 = vld [vmem:[%s413 + $0x4] sm:$0xf]
      %v793 = vld [vmem:[%s413 + $0x8] sm:$0xf]
      %v794 = vld [vmem:[%s413 + $0xc] sm:$0xf]
      %v795 = vld [vmem:[%s413 + $0x10] sm:$0xf]
      %v796 = vld [vmem:[%s413 + $0x14] sm:$0xf]
      %v797 = vld [vmem:[%s413 + $0x18] sm:$0xf]
      %v798 = vld [vmem:[%s413 + $0x1c] sm:$0xf]
      %v799 = vld [vmem:[%s413 + $0x20] sm:$0xf]
      %v800 = vld [vmem:[%s413 + $0x24] sm:$0xf]
      %v801 = vld [vmem:[%s413 + $0x28] sm:$0xf]
      %v802 = vld [vmem:[%s413 + $0x2c] sm:$0xf]
      %v803 = vld [vmem:[%s413 + $0x30] sm:$0xf]
      %v804 = vld [vmem:[%s413 + $0x34] sm:$0xf]
      %v805 = vld [vmem:[%s413 + $0x38] sm:$0xf]
      %v806 = vld [vmem:[%s413 + $0x3c] sm:$0xf]
      %v823 = vunpack.c.l.b16 %v791
      %v824 = vunpack.c.l.b16 %v792
      %v825 = vunpack.c.l.b16 %v793
      %v826 = vunpack.c.l.b16 %v794
      %v827 = vunpack.c.l.b16 %v795
      %v828 = vunpack.c.l.b16 %v796
      %v829 = vunpack.c.l.b16 %v797
      %v830 = vunpack.c.l.b16 %v798
      %v831 = vunpack.c.l.b16 %v799
      %v832 = vunpack.c.l.b16 %v800
      %v833 = vunpack.c.l.b16 %v801
      %v834 = vunpack.c.l.b16 %v802
      %v835 = vunpack.c.l.b16 %v803
      %v836 = vunpack.c.l.b16 %v804
      %v837 = vunpack.c.l.b16 %v805
      %v838 = vunpack.c.l.b16 %v806
      %v839 = vpack.c.b16 %v824, %v823
      %v840 = vpack.c.b16 %v826, %v825
      %v841 = vpack.c.b16 %v828, %v827
      %v842 = vpack.c.b16 %v830, %v829
      %v843 = vpack.c.b16 %v832, %v831
      %v844 = vpack.c.b16 %v834, %v833
      %v845 = vpack.c.b16 %v836, %v835
      %v846 = vpack.c.b16 %v838, %v837
      %855 = vmatpush.bf16.msra.mxu0 %v846
      %856 = vmatpush.bf16.msra.mxu0 %v845
      %857 = vmatpush.bf16.msra.mxu0 %v844
      %858 = vmatpush.bf16.msra.mxu0 %v843
      %859 = vmatpush.bf16.msra.mxu0 %v842
      %860 = vmatpush.bf16.msra.mxu0 %v841
      %861 = vmatpush.bf16.msra.mxu0 %v840
      %862 = vmatpush.bf16.msra.mxu0 %v839
      %863 = vmatmul.bf16.gmra.mxu0 %v790
      %v864 = vpop.f32.mrf.mxu0
      %v865 = vadd.f32 0.0, %v864
      %v866 = vpop.f32.mrf.mxu0
      %v867 = vadd.f32 0.0, %v866
      %868 = vdwg.mxu0
      %v869 = vadd.f32 %v788, %v865
      %v870 = vadd.f32 %v789, %v867
      %871 = vst.msk [vmem:[#allocation2] sm:$0xff] %vm690, %v869
      %872 = vst.msk [vmem:[#allocation2 + $0x8] sm:$0xff] %vm690, %v870
      %p873 = scmp.eq.s32.totalorder %s23, 1
      %p874 = pnand %p873, %p431
      %p875 = pneg %p874
      // Predicated region
      $region61: #{_lambda_.2} parent=51 // pred_check
        _
      $region62: #{_lambda_.2} parent=51 // pred_check_branch
        %877 = sbr.rel (%p874) target = $region64
      $region63: #{_lambda_.2} parent=51 // pred_region
        %v878 = vld [vmem:[#allocation2] sm:$0xff]
        %v879 = vld [vmem:[#allocation2 + $0x8] sm:$0xff]
        %v880 = vld [vmem:[%s6] sm:$0x1]
        %v881 = vld [vmem:[%s7] sm:$0x1]
        %v882 = vsel %vm690, %v878, 0.0
        %883 = vadd.xlane.f32.xlu0 %v882
        %v884 = vpop.xlane.xlu0 %883
        %v885 = vsel %vm690, %v879, 0.0
        %886 = vadd.xlane.f32.xlu0 %v885
        %v887 = vpop.xlane.xlu0 %886
        %v888 = vrcp.pop 32.0
        %v889 = vmul.f32 32.0, %v888
        %v890 = vsub.f32 1.0, %v889
        %v891 = vmul.f32 %v888, %v890
        %v892 = vadd.f32 %v888, %v891
        %vm893 = vweird.f32 %v888
        %v894 = vsel %vm893, %v888, %v892
        %v895 = vmul.f32 %v884, %v894
        %v896 = vmul.f32 %v887, %v894
        %v897 = vsub.f32 %v878, %v895
        %v898 = vsub.f32 %v879, %v896
        %v899 = vmul.f32 %v897, %v897
        %v900 = vmul.f32 %v898, %v898
        %v901 = vsel %vm690, %v899, 0.0
        %902 = vadd.xlane.f32.xlu0 %v901
        %v903 = vpop.xlane.xlu0 %902
        %v904 = vsel %vm690, %v900, 0.0
        %905 = vadd.xlane.f32.xlu0 %v904
        %v906 = vpop.xlane.xlu0 %905
        %v907 = vmul.f32 %v903, %v894
        %v908 = vmul.f32 %v906, %v894
        %v909 = vadd.f32 %v907, 1e-05
        %v910 = vadd.f32 %v908, 1e-05
        %v911 = vrsqrt.pop %v909
        %v912 = vmul.f32 %v911, %v909
        %v913 = vmul.f32 %v912, %v911
        %v914 = vmul.f32 0.5, %v913
        %v915 = vsub.f32 1.5, %v914
        %v916 = vmul.f32 %v911, %v915
        %vm917 = vweird.f32 %v909
        %vm918 = vweird.f32 %v911
        %vm919 = vmor %vm917, %vm918
        %v920 = vsel %vm919, %v911, %v916
        %v921 = vrsqrt.pop %v910
        %v922 = vmul.f32 %v921, %v910
        %v923 = vmul.f32 %v922, %v921
        %v924 = vmul.f32 0.5, %v923
        %v925 = vsub.f32 1.5, %v924
        %v926 = vmul.f32 %v921, %v925
        %vm927 = vweird.f32 %v910
        %vm928 = vweird.f32 %v921
        %vm929 = vmor %vm927, %vm928
        %v930 = vsel %vm929, %v921, %v926
        %v931 = vmul.f32 %v897, %v920
        %v932 = vmul.f32 %v898, %v930
        %v934 = vperm.slane %v880, 0
        %v936 = vmul.f32 %v931, %v934
        %v937 = vmul.f32 %v932, %v934
        %v939 = vperm.slane %v881, 0
        %v941 = vadd.f32 %v936, %v939
        %v942 = vadd.f32 %v937, %v939
        %943 = vst.msk [vmem:[%s8] sm:$0xff] %vm690, %v941
        %944 = vst.msk [vmem:[%s8 + $0x8] sm:$0xff] %vm690, %v942
      $region64: #{_lambda_.2} parent=51 // pred_fallthru
        _
      // Predicated region
      $region65: #{_lambda_.2} parent=51 // pred_check
        %p945 = pneg %p243
      $region66: #{_lambda_.2} parent=51 // pred_check_branch
        %947 = sbr.rel (%p945) target = $region68
      $region67: #{_lambda_.2} parent=51 // pred_region
        _
      $region68: #{_lambda_.2} parent=51 // pred_fallthru
        _
      // Predicated region
      $region69: #{_lambda_.2} parent=51 // pred_check
        %p948 = pneg %p243
      $region70: #{_lambda_.2} parent=51 // pred_check_branch
        %950 = sbr.rel (%p948) target = $region72
      $region71: #{_lambda_.2} parent=51 // pred_region
        _
      $region72: #{_lambda_.2} parent=51 // pred_fallthru
        _
    $region52: #{_lambda_.2} parent=5 // pred_fallthru
      _
    %p951 = scmp.le.s32.totalorder 2, %s14
    // Predicated region
    $region73: #{_lambda_.2} parent=5 // pred_check
      %p952 = pneg %p951
    $region74: #{_lambda_.2} parent=5 // pred_check_branch
      %954 = sbr.rel (%p952) target = $region76
    $region75: #{_lambda_.2} parent=5 // pred_region
      %s955 = ssub.s32 %s14, 2
    $region76: #{_lambda_.2} parent=5 // pred_fallthru
      _
  $region6: #{_lambda_.2} parent=0 // loop_footer
    %s18 = sadd.s32 1, %s14
  $region7: #{_lambda_.2} parent=0 // loop_footer_branch
    %13 = sbr.rel target = $region3
  $region8: #{_lambda_.2} parent=0 // loop_exit
    _

</llo_original>
